<compile_context>
chip_gen: v6e
topology: v6e:2x2x1
jax: 0.10.0
libtpu: 0.0.40
codegen_flags: <defaults>
</compile_context>

<pallas_src>
import functools

import jax
import jax.numpy as jnp
from jax.experimental import pallas as pl
from jax.experimental.pallas import tpu as pltpu

EPS = 1e-5


# --------------------------------------------------------------------------- in-kernel helpers
def _bn_lrelu_single(y, gamma, beta, slope):
    """Training-mode BatchNorm (biased, centered variance) + LeakyReLU (max form)."""
    cnt = float(y.shape[0])
    mean = jnp.sum(y, axis=0, keepdims=True) / cnt
    d = y - mean
    var = jnp.sum(d * d, axis=0, keepdims=True) / cnt
    q = d * (jax.lax.rsqrt(var + EPS) * gamma) + beta
    return jnp.maximum(q, slope * q)


def _bn_lrelu_pair(even, odd, gamma, beta, slope):
    """BatchNorm + LeakyReLU with statistics shared over the even and odd output halves."""
    cnt = 2.0 * float(even.shape[0])
    mean = (jnp.sum(even, axis=0, keepdims=True)
            + jnp.sum(odd, axis=0, keepdims=True)) / cnt
    de = even - mean
    do = odd - mean
    var = (jnp.sum(de * de, axis=0, keepdims=True)
           + jnp.sum(do * do, axis=0, keepdims=True)) / cnt
    scale = jax.lax.rsqrt(var + EPS) * gamma
    qe = de * scale + beta
    qo = do * scale + beta
    return jnp.maximum(qe, slope * qe), jnp.maximum(qo, slope * qo)


def _tconv4(A, P, n, wp_ref, mask_first, mask_last):
    """ConvTranspose1d(k=4, s=2, p=1) on a phase-blocked activation, tap-K-concat form.

    A:  [P*n, C] f32; block p holds sequence positions j*P + p for base rows j = 0..3.
    wp_ref: (2, 2*C, Cout) bf16; wp[0] = [W1;W3] (even parity), wp[1] = [W2;W0] (odd parity).
    Returns (even, odd) f32, each [P*n, Cout]:
      even block p -> new phase 2p   (out[2m]   = y[m]@W1 + y[m-1]@W3)
      odd  block p -> new phase 2p+1 (out[2m+1] = y[m]@W2 + y[m+1]@W0)
    """
    C = A.shape[1]
    A_bf = A.astype(jnp.bfloat16)
    zeros_blk = jnp.zeros((n, C), dtype=jnp.float32)
    # previous / next sequence position that crosses a base-row boundary, zero-padded at
    # each batch element's sequence start / end (padding=1).  Rolls stay f32 on the tiny
    # [n, C] blocks; every [P*n, *]-sized temporary below is bf16.
    prev_wrap = jnp.where(
        mask_first, zeros_blk,
        pltpu.roll(A[(P - 1) * n:, :], shift=1, axis=0)).astype(jnp.bfloat16)
    next_wrap = jnp.where(
        mask_last, zeros_blk,
        pltpu.roll(A[:n, :], shift=n - 1, axis=0)).astype(jnp.bfloat16)
    if P > 1:
        big_prev = jnp.concatenate([prev_wrap, A_bf[:(P - 1) * n, :]], axis=0)
        big_next = jnp.concatenate([A_bf[n:, :], next_wrap], axis=0)
    else:
        big_prev, big_next = prev_wrap, next_wrap

    even_in = jnp.concatenate([A_bf, big_prev], axis=1)     # [P*n, 2C] bf16
    odd_in = jnp.concatenate([A_bf, big_next], axis=1)      # [P*n, 2C] bf16
    even = jnp.dot(even_in, wp_ref[0], preferred_element_type=jnp.float32)
    odd = jnp.dot(odd_in, wp_ref[1], preferred_element_type=jnp.float32)
    return even, odd


# --------------------------------------------------------------------------- kernel 1: conv stack
def conv_stack_kernel(x_ref,
                      w1_ref, g1_ref, be1_ref,
                      w2_ref, g2_ref, be2_ref,
                      wp3_ref, g3_ref, be3_ref,
                      wp4_ref, g4_ref, be4_ref,
                      wp5_ref,
                      emb_ref, *, B, slope):
    n = B * 4
    row = jax.lax.broadcasted_iota(jnp.int32, (n, 1), 0)
    mask_first = (row % 4) == 0          # first base position of each batch element
    mask_last = (row % 4) == 3           # last base position

    # ---- layers 1,2: ConvTranspose1d(k=1) + BN + LeakyReLU (conv bias cancelled by BN)
    y = jnp.dot(x_ref[...].astype(jnp.bfloat16), w1_ref[...],
                preferred_element_type=jnp.float32)
    a = _bn_lrelu_single(y, g1_ref[...], be1_ref[...], slope)
    y = jnp.dot(a.astype(jnp.bfloat16), w2_ref[...],
                preferred_element_type=jnp.float32)
    a = _bn_lrelu_single(y, g2_ref[...], be2_ref[...], slope)

    # ---- layer 3: ConvTranspose1d(k=4,s=2,p=1) + BN + LeakyReLU   (L: 4 -> 8)
    e, o = _tconv4(a, 1, n, wp3_ref, mask_first, mask_last)
    e, o = _bn_lrelu_pair(e, o, g3_ref[...], be3_ref[...], slope)
    a = jnp.concatenate([e, o], axis=0)                           # phases [0, 1]

    # ---- layer 4: ConvTranspose1d(k=4,s=2,p=1) + BN + LeakyReLU   (L: 8 -> 16)
    e, o = _tconv4(a, 2, n, wp4_ref, mask_first, mask_last)
    e, o = _bn_lrelu_pair(e, o, g4_ref[...], be4_ref[...], slope)
    a = jnp.concatenate([e[:n], o[:n], e[n:], o[n:]], axis=0)     # phases [0, 1, 2, 3]

    # ---- layer 5: ConvTranspose1d(k=4,s=2,p=1), no BN/activation  (L: 16 -> 32)
    #      conv bias folded into the linear bias; no final concatenate -- even/odd row
    #      blocks are stored straight to their phase-indexed slots of the emb output.
    e, o = _tconv4(a, 4, n, wp5_ref, mask_first, mask_last)       # each [4n, 128] f32
    for p in range(4):
        emb_ref[2 * p, :, :] = e[p * n:(p + 1) * n, :].astype(jnp.bfloat16)
        emb_ref[2 * p + 1, :, :] = o[p * n:(p + 1) * n, :].astype(jnp.bfloat16)


# --------------------------------------------------------------------------- kernel 2: vocab projection
def vocab_proj_kernel(emb_ref, wlin_ref, blin_ref, out_ref):
    out_ref[...] = (jnp.dot(emb_ref[...], wlin_ref[...],
                            preferred_element_type=jnp.float32) + blin_ref[...])


# --------------------------------------------------------------------------- params
def init_params(key, base_cc, embedding_dim, vocab_size):
    chans = [base_cc * 16, base_cc * 8, base_cc * 4, base_cc * 2, base_cc, embedding_dim]
    keys = jax.random.split(key, 40)
    ki = iter(keys)

    def dense(k, cin, cout):
        return jax.random.normal(k, (cin, cout), jnp.float32) / jnp.sqrt(cin)

    p = {}
    # layers 1,2: pointwise convtranspose (k=1)
    for li, (cin, cout) in enumerate([(chans[0], chans[1]), (chans[1], chans[2])], start=1):
        p[f"w{li}"] = dense(next(ki), cin, cout)
        p[f"b{li}"] = 0.05 * jax.random.normal(next(ki), (1, cout), jnp.float32)
        p[f"g{li}"] = 1.0 + 0.1 * jax.random.normal(next(ki), (1, cout), jnp.float32)
        p[f"be{li}"] = 0.1 * jax.random.normal(next(ki), (1, cout), jnp.float32)
    # layers 3,4,5: convtranspose k=4,s=2,p=1 (tap k kept as a separate (Cin,Cout) matrix)
    for li, (cin, cout) in enumerate([(chans[2], chans[3]), (chans[3], chans[4]),
                                      (chans[4], chans[5])], start=3):
        for k in range(4):
            p[f"w{li}_{k}"] = dense(next(ki), cin, cout)
        p[f"b{li}"] = 0.05 * jax.random.normal(next(ki), (1, cout), jnp.float32)
        p[f"g{li}"] = 1.0 + 0.1 * jax.random.normal(next(ki), (1, cout), jnp.float32)
        p[f"be{li}"] = 0.1 * jax.random.normal(next(ki), (1, cout), jnp.float32)
    # embedding_inverse Linear(embedding_dim -> vocab_size), stored pre-transposed
    p["w_lin"] = dense(next(ki), embedding_dim, vocab_size)
    p["b_lin"] = 0.05 * jax.random.normal(next(ki), (1, vocab_size), jnp.float32)
    return p


def prepare_params(params, vocab_size):
    """One-time weight prep (outside the kernels):
       - pack the two taps per output parity along K: [W1;W3] (even) / [W2;W0] (odd),
       - cast MXU operands to bf16,
       - pad the vocab projection to a lane multiple (128),
       - fold the layer-5 conv bias into the linear bias (f32),
       - drop conv biases of layers 1-4 (cancelled exactly by training-mode BN)."""
    vp = ((vocab_size + 127) // 128) * 128
    pad = vp - vocab_size
    blin = params["b5"] @ params["w_lin"] + params["b_lin"]
    pp = {
        "w1": params["w1"].astype(jnp.bfloat16),
        "g1": params["g1"], "be1": params["be1"],
        "w2": params["w2"].astype(jnp.bfloat16),
        "g2": params["g2"], "be2": params["be2"],
        "wlin": jnp.pad(params["w_lin"], ((0, 0), (0, pad))).astype(jnp.bfloat16),
        "blin": jnp.pad(blin, ((0, 0), (0, pad))),
    }
    for li in (3, 4, 5):
        w_even = jnp.concatenate([params[f"w{li}_1"], params[f"w{li}_3"]], axis=0)
        w_odd = jnp.concatenate([params[f"w{li}_2"], params[f"w{li}_0"]], axis=0)
        pp[f"wp{li}"] = jnp.stack([w_even, w_odd], axis=0).astype(jnp.bfloat16)
        if li != 5:
            pp[f"g{li}"] = params[f"g{li}"]
            pp[f"be{li}"] = params[f"be{li}"]
    return pp


# --------------------------------------------------------------------------- sizing helpers
def _pick_vocab_tile(vp, cap=2048):
    """Largest multiple-of-128 tile that divides vp and is <= cap lanes."""
    nb = vp // 128
    best = 1
    for d in range(1, nb + 1):
        if nb % d == 0 and d * 128 <= cap:
            best = d
    return best * 128


def _clamp_vmem(nbytes):
    return int(min(64 * 1024 * 1024, max(32 * 1024 * 1024, nbytes)))


# --------------------------------------------------------------------------- wrapper
def cub_sent_decoder_map(z, pp, *, base_cc, embedding_dim, vocab_size, slope=0.2):
    B = z.shape[0]
    n = B * 4
    c0, c1, c2 = base_cc * 16, base_cc * 8, base_cc * 4
    c3, c4 = base_cc * 2, base_cc
    vp = pp["wlin"].shape[1]

    # torch: z.reshape([-1, base_cc*16, 4]) (NCL)  ->  channel-last base rows [B*4, C0]
    x = jnp.transpose(z.reshape(B, c0, 4), (0, 2, 1)).reshape(n, c0)

    # ---- call 1: conv/BN/LeakyReLU stack -> phase-blocked bf16 embedding (8, n, 128)
    conv_flops = (2 * n * (c0 * c1 + c1 * c2) + 8 * n * c2 * c3
                  + 16 * n * c3 * c4 + 32 * n * c4 * embedding_dim)
    conv_bytes = (x.size * 4
                  + sum(int(v.size) * v.dtype.itemsize for k, v in pp.items()
                        if k not in ("wlin", "blin"))
                  + 8 * n * embedding_dim * 2)
    conv_vmem = _clamp_vmem(
        4 * n * (c0 + 3 * c1 + 3 * c2 + 8 * c3 + 10 * c4 + 12 * embedding_dim) * 4
        + int(conv_bytes) + (1 << 20))

    emb = pl.pallas_call(
        functools.partial(conv_stack_kernel, B=B, slope=slope),
        out_shape=jax.ShapeDtypeStruct((8, n, embedding_dim), jnp.bfloat16),
        compiler_params=pltpu.CompilerParams(vmem_limit_bytes=conv_vmem),
        cost_estimate=pl.CostEstimate(flops=int(conv_flops),
                                      transcendentals=int(c1 + c2 + c3 + c4),
                                      bytes_accessed=int(conv_bytes)),
    )(x,
      pp["w1"], pp["g1"], pp["be1"],
      pp["w2"], pp["g2"], pp["be2"],
      pp["wp3"], pp["g3"], pp["be3"],
      pp["wp4"], pp["g4"], pp["be4"],
      pp["wp5"])

    # ---- call 2: vocab projection, grid = (vocab tiles, 8 phases), both axes parallel
    tn = _pick_vocab_tile(vp)
    nv = vp // tn
    lin_flops = 2 * 8 * n * embedding_dim * vp
    lin_bytes = (8 * n * embedding_dim * 2 + embedding_dim * vp * 2
                 + vp * 4 + n * 8 * vp * 4)
    lin_vmem = _clamp_vmem(4 * (n * embedding_dim * 2 + embedding_dim * tn * 2
                                + tn * 4 + n * tn * 4) + (2 << 20))

    out = pl.pallas_call(
        vocab_proj_kernel,
        out_shape=jax.ShapeDtypeStruct((n, 8 * vp), jnp.float32),
        grid_spec=pltpu.PrefetchScalarGridSpec(
            num_scalar_prefetch=0,
            grid=(nv, 8),
            in_specs=[
                pl.BlockSpec((None, n, embedding_dim), lambda v, ph: (ph, 0, 0)),
                pl.BlockSpec((embedding_dim, tn), lambda v, ph: (0, v)),
                pl.BlockSpec((1, tn), lambda v, ph: (0, v)),
            ],
            out_specs=pl.BlockSpec((n, tn), lambda v, ph: (0, ph * nv + v)),
        ),
        compiler_params=pltpu.CompilerParams(
            dimension_semantics=("parallel", "parallel"),
            vmem_limit_bytes=lin_vmem),
        cost_estimate=pl.CostEstimate(flops=int(lin_flops), transcendentals=0,
                                      bytes_accessed=int(lin_bytes)),
    )(emb, pp["wlin"], pp["blin"])

    # (B*4, 8*Vp): row b*4+j, lane block ph  ->  (b, j*8+ph, :)  -- free row-major reshape
    return out.reshape(B, 32, vp)[:, :, :vocab_size]


# --------------------------------------------------------------------------- pure-JAX reference
def _ref_bn(x, g, be):
    mean = jnp.mean(x, axis=(0, 2), keepdims=True)
    var = jnp.mean((x - mean) ** 2, axis=(0, 2), keepdims=True)
    return (x - mean) * jax.lax.rsqrt(var + EPS) * g.reshape(1, -1, 1) + be.reshape(1, -1, 1)


def _ref_tconv_k1(x, w, b):
    return jnp.einsum('bcl,cd->bdl', x, w) + b.reshape(1, -1, 1)


def _ref_tconv4(x, ws, b):
    Bq, _, L = x.shape
    cout = ws[0].shape[1]
    full = jnp.zeros((Bq, cout, 2 * L + 2), jnp.float32)
    for k in range(4):
        contrib = jnp.einsum('bcl,cd->bdl', x, ws[k])
        full = full.at[:, :, k:k + 2 * L:2].add(contrib)
    return full[:, :, 1:2 * L + 1] + b.reshape(1, -1, 1)


def reference_forward(z, params, *, base_cc, slope=0.2):
    B = z.shape[0]
    h = z.reshape(B, base_cc * 16, 4)
    lrelu = lambda t: jnp.where(t > 0, t, slope * t)
    h = lrelu(_ref_bn(_ref_tconv_k1(h, params["w1"], params["b1"]),
                      params["g1"], params["be1"]))
    h = lrelu(_ref_bn(_ref_tconv_k1(h, params["w2"], params["b2"]),
                      params["g2"], params["be2"]))
    h = lrelu(_ref_bn(_ref_tconv4(h, [params[f"w3_{k}"] for k in range(4)], params["b3"]),
                      params["g3"], params["be3"]))
    h = lrelu(_ref_bn(_ref_tconv4(h, [params[f"w4_{k}"] for k in range(4)], params["b4"]),
                      params["g4"], params["be4"]))
    h = _ref_tconv4(h, [params[f"w5_{k}"] for k in range(4)], params["b5"])
    emb = jnp.transpose(h, (0, 2, 1))                               # (B, 32, 128)
    return emb @ params["w_lin"] + params["b_lin"].reshape(1, 1, -1)


# --------------------------------------------------------------------------- main
if __name__ == "__main__":
    B = 2
    base_cc = 8            # small synthetic config (module default is 32)
    embedding_dim = 128    # module asserts embedding_dim == 128
    vocab_size = 256       # small synthetic vocab (module default is 1590)

    key = jax.random.PRNGKey(0)
    kp, kz = jax.random.split(key)
    params = init_params(kp, base_cc, embedding_dim, vocab_size)
    pp = prepare_params(params, vocab_size)

    input_dim = 16 * base_cc * 4
    z = jax.random.normal(kz, (B, input_dim), jnp.float32)

    fwd = jax.jit(functools.partial(cub_sent_decoder_map, base_cc=base_cc,
                                    embedding_dim=embedding_dim, vocab_size=vocab_size))
    out = jax.block_until_ready(fwd(z, pp))
    assert out.shape == (B, 32, vocab_size), out.shape
    assert bool(jnp.all(jnp.isfinite(out)))

    # numerical check vs a pure-JAX f32 reference (bf16 MXU operands -> loose tolerance)
    ref = reference_forward(z, params, base_cc=base_cc)
    err = float(jnp.max(jnp.abs(out - ref)))
    scale = float(jnp.max(jnp.abs(ref)))
    assert err <= 0.1 * scale + 0.1, (err, scale)

    print("KERNEL_OK")
</pallas_src>

<mosaic_0001>
module attributes {stable_mosaic.version = 11 : i64} {
  func.func @conv_stack_kernel(%arg0: memref<8x128xf32, #tpu.memory_space<vmem>>, %arg1: memref<128x64xbf16, #tpu.memory_space<vmem>>, %arg2: memref<1x64xf32, #tpu.memory_space<vmem>>, %arg3: memref<1x64xf32, #tpu.memory_space<vmem>>, %arg4: memref<64x32xbf16, #tpu.memory_space<vmem>>, %arg5: memref<1x32xf32, #tpu.memory_space<vmem>>, %arg6: memref<1x32xf32, #tpu.memory_space<vmem>>, %arg7: memref<2x64x16xbf16, #tpu.memory_space<vmem>>, %arg8: memref<1x16xf32, #tpu.memory_space<vmem>>, %arg9: memref<1x16xf32, #tpu.memory_space<vmem>>, %arg10: memref<2x32x8xbf16, #tpu.memory_space<vmem>>, %arg11: memref<1x8xf32, #tpu.memory_space<vmem>>, %arg12: memref<1x8xf32, #tpu.memory_space<vmem>>, %arg13: memref<2x16x128xbf16, #tpu.memory_space<vmem>>, %arg14: memref<8x8x128xbf16, #tpu.memory_space<vmem>>) attributes {dimension_semantics = [], scalar_prefetch = 0 : i64, scratch_operands = 0 : i64, tpu.core_type = #tpu.core_type<tc>} {
    %0 = tpu.iota {dimensions = array<i32: 0>} : vector<8x1xi32>
    %c4_i32 = arith.constant 4 : i32
    %c0_i32 = arith.constant 0 : i32
    %1 = arith.cmpi eq, %c4_i32, %c0_i32 : i32
    %c1_i32 = arith.constant 1 : i32
    %2 = arith.select %1, %c1_i32, %c4_i32 : i32
    %3 = vector.broadcast %2 : i32 to vector<8x1xi32>
    %4 = arith.remsi %0, %3 : vector<8x1xi32>
    %c0_i32_0 = arith.constant 0 : i32
    %5 = vector.broadcast %c0_i32_0 : i32 to vector<8x1xi32>
    %6 = arith.cmpi ne, %4, %5 : vector<8x1xi32>
    %c0_i32_1 = arith.constant 0 : i32
    %7 = vector.broadcast %c0_i32_1 : i32 to vector<8x1xi32>
    %8 = arith.cmpi slt, %4, %7 : vector<8x1xi32>
    %c0_i32_2 = arith.constant 0 : i32
    %9 = arith.cmpi slt, %2, %c0_i32_2 : i32
    %10 = vector.broadcast %9 : i1 to vector<8x1xi1>
    %11 = vector.broadcast %10 : vector<8x1xi1> to vector<8x1xi1>
    %12 = arith.xori %8, %11 : vector<8x1xi1>
    %13 = arith.andi %12, %6 : vector<8x1xi1>
    %14 = vector.broadcast %2 : i32 to vector<8x1xi32>
    %15 = arith.addi %4, %14 : vector<8x1xi32>
    %16 = arith.select %13, %15, %4 : vector<8x1xi1>, vector<8x1xi32>
    %c0_i32_3 = arith.constant 0 : i32
    %17 = vector.broadcast %c0_i32_3 : i32 to vector<8x1xi32>
    %18 = arith.cmpi eq, %16, %17 : vector<8x1xi32>
    %c4_i32_4 = arith.constant 4 : i32
    %c0_i32_5 = arith.constant 0 : i32
    %19 = arith.cmpi eq, %c4_i32_4, %c0_i32_5 : i32
    %c1_i32_6 = arith.constant 1 : i32
    %20 = arith.select %19, %c1_i32_6, %c4_i32_4 : i32
    %21 = vector.broadcast %20 : i32 to vector<8x1xi32>
    %22 = arith.remsi %0, %21 : vector<8x1xi32>
    %c0_i32_7 = arith.constant 0 : i32
    %23 = vector.broadcast %c0_i32_7 : i32 to vector<8x1xi32>
    %24 = arith.cmpi ne, %22, %23 : vector<8x1xi32>
    %c0_i32_8 = arith.constant 0 : i32
    %25 = vector.broadcast %c0_i32_8 : i32 to vector<8x1xi32>
    %26 = arith.cmpi slt, %22, %25 : vector<8x1xi32>
    %c0_i32_9 = arith.constant 0 : i32
    %27 = arith.cmpi slt, %20, %c0_i32_9 : i32
    %28 = vector.broadcast %27 : i1 to vector<8x1xi1>
    %29 = vector.broadcast %28 : vector<8x1xi1> to vector<8x1xi1>
    %30 = arith.xori %26, %29 : vector<8x1xi1>
    %31 = arith.andi %30, %24 : vector<8x1xi1>
    %32 = vector.broadcast %20 : i32 to vector<8x1xi32>
    %33 = arith.addi %22, %32 : vector<8x1xi32>
    %34 = arith.select %31, %33, %22 : vector<8x1xi1>, vector<8x1xi32>
    %c3_i32 = arith.constant 3 : i32
    %35 = vector.broadcast %c3_i32 : i32 to vector<8x1xi32>
    %36 = arith.cmpi eq, %34, %35 : vector<8x1xi32>
    %c0 = arith.constant 0 : index
    %c0_10 = arith.constant 0 : index
    %37 = vector.load %arg0[%c0, %c0_10] : memref<8x128xf32, #tpu.memory_space<vmem>>, vector<8x128xf32>
    %38 = arith.truncf %37 : vector<8x128xf32> to vector<8x128xbf16>
    %c0_11 = arith.constant 0 : index
    %c0_12 = arith.constant 0 : index
    %39 = vector.load %arg1[%c0_11, %c0_12] : memref<128x64xbf16, #tpu.memory_space<vmem>>, vector<128x64xbf16>
    %cst = arith.constant dense<0.000000e+00> : vector<8x64xf32>
    %40 = tpu.matmul %38, %39, %cst {dimension_numbers = #tpu.dot_dimension_numbers<[1], [0], [0], [1], [0, 0, 1, 1], [], []>} : vector<8x128xbf16>, vector<128x64xbf16>, vector<8x64xf32> -> vector<8x64xf32>
    %c0_13 = arith.constant 0 : index
    %c0_14 = arith.constant 0 : index
    %41 = vector.load %arg2[%c0_13, %c0_14] : memref<1x64xf32, #tpu.memory_space<vmem>>, vector<1x64xf32>
    %c0_15 = arith.constant 0 : index
    %c0_16 = arith.constant 0 : index
    %42 = vector.load %arg3[%c0_15, %c0_16] : memref<1x64xf32, #tpu.memory_space<vmem>>, vector<1x64xf32>
    %cst_17 = arith.constant dense<0.000000e+00> : vector<64xf32>
    %43 = vector.multi_reduction <add>, %40, %cst_17 [0] : vector<8x64xf32> to vector<64xf32>
    %44 = vector.shape_cast %43 : vector<64xf32> to vector<1x64xf32>
    %cst_18 = arith.constant 8.000000e+00 : f32
    %45 = vector.broadcast %cst_18 : f32 to vector<1x64xf32>
    %46 = arith.divf %44, %45 : vector<1x64xf32>
    %47 = vector.broadcast %46 : vector<1x64xf32> to vector<8x64xf32>
    %48 = arith.subf %40, %47 : vector<8x64xf32>
    %49 = arith.mulf %48, %48 : vector<8x64xf32>
    %cst_19 = arith.constant dense<0.000000e+00> : vector<64xf32>
    %50 = vector.multi_reduction <add>, %49, %cst_19 [0] : vector<8x64xf32> to vector<64xf32>
    %51 = vector.shape_cast %50 : vector<64xf32> to vector<1x64xf32>
    %cst_20 = arith.constant 8.000000e+00 : f32
    %52 = vector.broadcast %cst_20 : f32 to vector<1x64xf32>
    %53 = arith.divf %51, %52 : vector<1x64xf32>
    %cst_21 = arith.constant 9.99999974E-6 : f32
    %54 = vector.broadcast %cst_21 : f32 to vector<1x64xf32>
    %55 = arith.addf %53, %54 : vector<1x64xf32>
    %56 = math.rsqrt %55 : vector<1x64xf32>
    %57 = arith.mulf %56, %41 : vector<1x64xf32>
    %58 = vector.broadcast %57 : vector<1x64xf32> to vector<8x64xf32>
    %59 = arith.mulf %48, %58 : vector<8x64xf32>
    %60 = vector.broadcast %42 : vector<1x64xf32> to vector<8x64xf32>
    %61 = arith.addf %59, %60 : vector<8x64xf32>
    %cst_22 = arith.constant 2.000000e-01 : f32
    %62 = vector.broadcast %cst_22 : f32 to vector<8x64xf32>
    %63 = arith.mulf %62, %61 : vector<8x64xf32>
    %64 = arith.maximumf %61, %63 : vector<8x64xf32>
    %65 = arith.truncf %64 : vector<8x64xf32> to vector<8x64xbf16>
    %c0_23 = arith.constant 0 : index
    %c0_24 = arith.constant 0 : index
    %66 = vector.load %arg4[%c0_23, %c0_24] : memref<64x32xbf16, #tpu.memory_space<vmem>>, vector<64x32xbf16>
    %cst_25 = arith.constant dense<0.000000e+00> : vector<8x32xf32>
    %67 = tpu.matmul %65, %66, %cst_25 {dimension_numbers = #tpu.dot_dimension_numbers<[1], [0], [0], [1], [0, 0, 1, 1], [], []>} : vector<8x64xbf16>, vector<64x32xbf16>, vector<8x32xf32> -> vector<8x32xf32>
    %c0_26 = arith.constant 0 : index
    %c0_27 = arith.constant 0 : index
    %68 = vector.load %arg5[%c0_26, %c0_27] : memref<1x32xf32, #tpu.memory_space<vmem>>, vector<1x32xf32>
    %c0_28 = arith.constant 0 : index
    %c0_29 = arith.constant 0 : index
    %69 = vector.load %arg6[%c0_28, %c0_29] : memref<1x32xf32, #tpu.memory_space<vmem>>, vector<1x32xf32>
    %cst_30 = arith.constant dense<0.000000e+00> : vector<32xf32>
    %70 = vector.multi_reduction <add>, %67, %cst_30 [0] : vector<8x32xf32> to vector<32xf32>
    %71 = vector.shape_cast %70 : vector<32xf32> to vector<1x32xf32>
    %cst_31 = arith.constant 8.000000e+00 : f32
    %72 = vector.broadcast %cst_31 : f32 to vector<1x32xf32>
    %73 = arith.divf %71, %72 : vector<1x32xf32>
    %74 = vector.broadcast %73 : vector<1x32xf32> to vector<8x32xf32>
    %75 = arith.subf %67, %74 : vector<8x32xf32>
    %76 = arith.mulf %75, %75 : vector<8x32xf32>
    %cst_32 = arith.constant dense<0.000000e+00> : vector<32xf32>
    %77 = vector.multi_reduction <add>, %76, %cst_32 [0] : vector<8x32xf32> to vector<32xf32>
    %78 = vector.shape_cast %77 : vector<32xf32> to vector<1x32xf32>
    %cst_33 = arith.constant 8.000000e+00 : f32
    %79 = vector.broadcast %cst_33 : f32 to vector<1x32xf32>
    %80 = arith.divf %78, %79 : vector<1x32xf32>
    %cst_34 = arith.constant 9.99999974E-6 : f32
    %81 = vector.broadcast %cst_34 : f32 to vector<1x32xf32>
    %82 = arith.addf %80, %81 : vector<1x32xf32>
    %83 = math.rsqrt %82 : vector<1x32xf32>
    %84 = arith.mulf %83, %68 : vector<1x32xf32>
    %85 = vector.broadcast %84 : vector<1x32xf32> to vector<8x32xf32>
    %86 = arith.mulf %75, %85 : vector<8x32xf32>
    %87 = vector.broadcast %69 : vector<1x32xf32> to vector<8x32xf32>
    %88 = arith.addf %86, %87 : vector<8x32xf32>
    %cst_35 = arith.constant 2.000000e-01 : f32
    %89 = vector.broadcast %cst_35 : f32 to vector<8x32xf32>
    %90 = arith.mulf %89, %88 : vector<8x32xf32>
    %91 = arith.maximumf %88, %90 : vector<8x32xf32>
    %92 = arith.truncf %91 : vector<8x32xf32> to vector<8x32xbf16>
    %cst_36 = arith.constant 0.000000e+00 : f32
    %93 = vector.broadcast %cst_36 : f32 to vector<8x32xf32>
    %c1_i32_37 = arith.constant 1 : i32
    %94 = tpu.dynamic_rotate %91 by %c1_i32_37 dim 0 : vector<8x32xf32>, i32 -> vector<8x32xf32>
    %95 = vector.shape_cast %18 : vector<8x1xi1> to vector<8x1xi1>
    %96 = vector.broadcast %95 : vector<8x1xi1> to vector<8x32xi1>
    %97 = arith.select %96, %93, %94 : vector<8x32xi1>, vector<8x32xf32>
    %98 = arith.truncf %97 : vector<8x32xf32> to vector<8x32xbf16>
    %c7_i32 = arith.constant 7 : i32
    %99 = tpu.dynamic_rotate %91 by %c7_i32 dim 0 : vector<8x32xf32>, i32 -> vector<8x32xf32>
    %100 = vector.shape_cast %36 : vector<8x1xi1> to vector<8x1xi1>
    %101 = vector.broadcast %100 : vector<8x1xi1> to vector<8x32xi1>
    %102 = arith.select %101, %93, %99 : vector<8x32xi1>, vector<8x32xf32>
    %103 = arith.truncf %102 : vector<8x32xf32> to vector<8x32xbf16>
    %104 = tpu.concatenate %92, %98 in 1 : vector<8x32xbf16>, vector<8x32xbf16> -> vector<8x64xbf16>
    %105 = tpu.concatenate %92, %103 in 1 : vector<8x32xbf16>, vector<8x32xbf16> -> vector<8x64xbf16>
    %c0_38 = arith.constant 0 : index
    %c0_39 = arith.constant 0 : index
    %c0_40 = arith.constant 0 : index
    %106 = vector.load %arg7[%c0_38, %c0_39, %c0_40] : memref<2x64x16xbf16, #tpu.memory_space<vmem>>, vector<1x64x16xbf16>
    %107 = vector.shape_cast %106 : vector<1x64x16xbf16> to vector<64x16xbf16>
    %cst_41 = arith.constant dense<0.000000e+00> : vector<8x16xf32>
    %108 = tpu.matmul %104, %107, %cst_41 {dimension_numbers = #tpu.dot_dimension_numbers<[1], [0], [0], [1], [0, 0, 1, 1], [], []>} : vector<8x64xbf16>, vector<64x16xbf16>, vector<8x16xf32> -> vector<8x16xf32>
    %c1 = arith.constant 1 : index
    %c0_42 = arith.constant 0 : index
    %c0_43 = arith.constant 0 : index
    %109 = vector.load %arg7[%c1, %c0_42, %c0_43] : memref<2x64x16xbf16, #tpu.memory_space<vmem>>, vector<1x64x16xbf16>
    %110 = vector.shape_cast %109 : vector<1x64x16xbf16> to vector<64x16xbf16>
    %cst_44 = arith.constant dense<0.000000e+00> : vector<8x16xf32>
    %111 = tpu.matmul %105, %110, %cst_44 {dimension_numbers = #tpu.dot_dimension_numbers<[1], [0], [0], [1], [0, 0, 1, 1], [], []>} : vector<8x64xbf16>, vector<64x16xbf16>, vector<8x16xf32> -> vector<8x16xf32>
    %c0_45 = arith.constant 0 : index
    %c0_46 = arith.constant 0 : index
    %112 = vector.load %arg8[%c0_45, %c0_46] : memref<1x16xf32, #tpu.memory_space<vmem>>, vector<1x16xf32>
    %c0_47 = arith.constant 0 : index
    %c0_48 = arith.constant 0 : index
    %113 = vector.load %arg9[%c0_47, %c0_48] : memref<1x16xf32, #tpu.memory_space<vmem>>, vector<1x16xf32>
    %cst_49 = arith.constant dense<0.000000e+00> : vector<16xf32>
    %114 = vector.multi_reduction <add>, %108, %cst_49 [0] : vector<8x16xf32> to vector<16xf32>
    %115 = vector.shape_cast %114 : vector<16xf32> to vector<1x16xf32>
    %cst_50 = arith.constant dense<0.000000e+00> : vector<16xf32>
    %116 = vector.multi_reduction <add>, %111, %cst_50 [0] : vector<8x16xf32> to vector<16xf32>
    %117 = vector.shape_cast %116 : vector<16xf32> to vector<1x16xf32>
    %118 = arith.addf %115, %117 : vector<1x16xf32>
    %cst_51 = arith.constant 1.600000e+01 : f32
    %119 = vector.broadcast %cst_51 : f32 to vector<1x16xf32>
    %120 = arith.divf %118, %119 : vector<1x16xf32>
    %121 = vector.broadcast %120 : vector<1x16xf32> to vector<8x16xf32>
    %122 = arith.subf %108, %121 : vector<8x16xf32>
    %123 = vector.broadcast %120 : vector<1x16xf32> to vector<8x16xf32>
    %124 = arith.subf %111, %123 : vector<8x16xf32>
    %125 = arith.mulf %122, %122 : vector<8x16xf32>
    %cst_52 = arith.constant dense<0.000000e+00> : vector<16xf32>
    %126 = vector.multi_reduction <add>, %125, %cst_52 [0] : vector<8x16xf32> to vector<16xf32>
    %127 = vector.shape_cast %126 : vector<16xf32> to vector<1x16xf32>
    %128 = arith.mulf %124, %124 : vector<8x16xf32>
    %cst_53 = arith.constant dense<0.000000e+00> : vector<16xf32>
    %129 = vector.multi_reduction <add>, %128, %cst_53 [0] : vector<8x16xf32> to vector<16xf32>
    %130 = vector.shape_cast %129 : vector<16xf32> to vector<1x16xf32>
    %131 = arith.addf %127, %130 : vector<1x16xf32>
    %cst_54 = arith.constant 1.600000e+01 : f32
    %132 = vector.broadcast %cst_54 : f32 to vector<1x16xf32>
    %133 = arith.divf %131, %132 : vector<1x16xf32>
    %cst_55 = arith.constant 9.99999974E-6 : f32
    %134 = vector.broadcast %cst_55 : f32 to vector<1x16xf32>
    %135 = arith.addf %133, %134 : vector<1x16xf32>
    %136 = math.rsqrt %135 : vector<1x16xf32>
    %137 = arith.mulf %136, %112 : vector<1x16xf32>
    %138 = vector.broadcast %137 : vector<1x16xf32> to vector<8x16xf32>
    %139 = arith.mulf %122, %138 : vector<8x16xf32>
    %140 = vector.broadcast %113 : vector<1x16xf32> to vector<8x16xf32>
    %141 = arith.addf %139, %140 : vector<8x16xf32>
    %142 = vector.broadcast %137 : vector<1x16xf32> to vector<8x16xf32>
    %143 = arith.mulf %124, %142 : vector<8x16xf32>
    %144 = vector.broadcast %113 : vector<1x16xf32> to vector<8x16xf32>
    %145 = arith.addf %143, %144 : vector<8x16xf32>
    %cst_56 = arith.constant 2.000000e-01 : f32
    %146 = vector.broadcast %cst_56 : f32 to vector<8x16xf32>
    %147 = arith.mulf %146, %141 : vector<8x16xf32>
    %148 = arith.maximumf %141, %147 : vector<8x16xf32>
    %cst_57 = arith.constant 2.000000e-01 : f32
    %149 = vector.broadcast %cst_57 : f32 to vector<8x16xf32>
    %150 = arith.mulf %149, %145 : vector<8x16xf32>
    %151 = arith.maximumf %145, %150 : vector<8x16xf32>
    %152 = tpu.concatenate %148, %151 in 0 : vector<8x16xf32>, vector<8x16xf32> -> vector<16x16xf32>
    %153 = arith.truncf %152 : vector<16x16xf32> to vector<16x16xbf16>
    %cst_58 = arith.constant 0.000000e+00 : f32
    %154 = vector.broadcast %cst_58 : f32 to vector<8x16xf32>
    %155 = vector.extract_strided_slice %152 {offsets = [8, 0], sizes = [8, 16], strides = [1, 1]} : vector<16x16xf32> to vector<8x16xf32>
    %c1_i32_59 = arith.constant 1 : i32
    %156 = tpu.dynamic_rotate %155 by %c1_i32_59 dim 0 : vector<8x16xf32>, i32 -> vector<8x16xf32>
    %157 = vector.shape_cast %18 : vector<8x1xi1> to vector<8x1xi1>
    %158 = vector.broadcast %157 : vector<8x1xi1> to vector<8x16xi1>
    %159 = arith.select %158, %154, %156 : vector<8x16xi1>, vector<8x16xf32>
    %160 = arith.truncf %159 : vector<8x16xf32> to vector<8x16xbf16>
    %161 = vector.extract_strided_slice %152 {offsets = [0, 0], sizes = [8, 16], strides = [1, 1]} : vector<16x16xf32> to vector<8x16xf32>
    %c7_i32_60 = arith.constant 7 : i32
    %162 = tpu.dynamic_rotate %161 by %c7_i32_60 dim 0 : vector<8x16xf32>, i32 -> vector<8x16xf32>
    %163 = vector.shape_cast %36 : vector<8x1xi1> to vector<8x1xi1>
    %164 = vector.broadcast %163 : vector<8x1xi1> to vector<8x16xi1>
    %165 = arith.select %164, %154, %162 : vector<8x16xi1>, vector<8x16xf32>
    %166 = arith.truncf %165 : vector<8x16xf32> to vector<8x16xbf16>
    %167 = vector.extract_strided_slice %153 {offsets = [0, 0], sizes = [8, 16], strides = [1, 1]} : vector<16x16xbf16> to vector<8x16xbf16>
    %168 = tpu.concatenate %160, %167 in 0 : vector<8x16xbf16>, vector<8x16xbf16> -> vector<16x16xbf16>
    %169 = vector.extract_strided_slice %153 {offsets = [8, 0], sizes = [8, 16], strides = [1, 1]} : vector<16x16xbf16> to vector<8x16xbf16>
    %170 = tpu.concatenate %169, %166 in 0 : vector<8x16xbf16>, vector<8x16xbf16> -> vector<16x16xbf16>
    %171 = tpu.concatenate %153, %168 in 1 : vector<16x16xbf16>, vector<16x16xbf16> -> vector<16x32xbf16>
    %172 = tpu.concatenate %153, %170 in 1 : vector<16x16xbf16>, vector<16x16xbf16> -> vector<16x32xbf16>
    %c0_61 = arith.constant 0 : index
    %c0_62 = arith.constant 0 : index
    %c0_63 = arith.constant 0 : index
    %173 = vector.load %arg10[%c0_61, %c0_62, %c0_63] : memref<2x32x8xbf16, #tpu.memory_space<vmem>>, vector<1x32x8xbf16>
    %174 = vector.shape_cast %173 : vector<1x32x8xbf16> to vector<32x8xbf16>
    %cst_64 = arith.constant dense<0.000000e+00> : vector<16x8xf32>
    %175 = tpu.matmul %171, %174, %cst_64 {dimension_numbers = #tpu.dot_dimension_numbers<[1], [0], [0], [1], [0, 0, 1, 1], [], []>} : vector<16x32xbf16>, vector<32x8xbf16>, vector<16x8xf32> -> vector<16x8xf32>
    %c1_65 = arith.constant 1 : index
    %c0_66 = arith.constant 0 : index
    %c0_67 = arith.constant 0 : index
    %176 = vector.load %arg10[%c1_65, %c0_66, %c0_67] : memref<2x32x8xbf16, #tpu.memory_space<vmem>>, vector<1x32x8xbf16>
    %177 = vector.shape_cast %176 : vector<1x32x8xbf16> to vector<32x8xbf16>
    %cst_68 = arith.constant dense<0.000000e+00> : vector<16x8xf32>
    %178 = tpu.matmul %172, %177, %cst_68 {dimension_numbers = #tpu.dot_dimension_numbers<[1], [0], [0], [1], [0, 0, 1, 1], [], []>} : vector<16x32xbf16>, vector<32x8xbf16>, vector<16x8xf32> -> vector<16x8xf32>
    %c0_69 = arith.constant 0 : index
    %c0_70 = arith.constant 0 : index
    %179 = vector.load %arg11[%c0_69, %c0_70] : memref<1x8xf32, #tpu.memory_space<vmem>>, vector<1x8xf32>
    %c0_71 = arith.constant 0 : index
    %c0_72 = arith.constant 0 : index
    %180 = vector.load %arg12[%c0_71, %c0_72] : memref<1x8xf32, #tpu.memory_space<vmem>>, vector<1x8xf32>
    %cst_73 = arith.constant dense<0.000000e+00> : vector<8xf32>
    %181 = vector.multi_reduction <add>, %175, %cst_73 [0] : vector<16x8xf32> to vector<8xf32>
    %182 = vector.shape_cast %181 : vector<8xf32> to vector<1x8xf32>
    %cst_74 = arith.constant dense<0.000000e+00> : vector<8xf32>
    %183 = vector.multi_reduction <add>, %178, %cst_74 [0] : vector<16x8xf32> to vector<8xf32>
    %184 = vector.shape_cast %183 : vector<8xf32> to vector<1x8xf32>
    %185 = arith.addf %182, %184 : vector<1x8xf32>
    %cst_75 = arith.constant 3.200000e+01 : f32
    %186 = vector.broadcast %cst_75 : f32 to vector<1x8xf32>
    %187 = arith.divf %185, %186 : vector<1x8xf32>
    %188 = vector.broadcast %187 : vector<1x8xf32> to vector<16x8xf32>
    %189 = arith.subf %175, %188 : vector<16x8xf32>
    %190 = vector.broadcast %187 : vector<1x8xf32> to vector<16x8xf32>
    %191 = arith.subf %178, %190 : vector<16x8xf32>
    %192 = arith.mulf %189, %189 : vector<16x8xf32>
    %cst_76 = arith.constant dense<0.000000e+00> : vector<8xf32>
    %193 = vector.multi_reduction <add>, %192, %cst_76 [0] : vector<16x8xf32> to vector<8xf32>
    %194 = vector.shape_cast %193 : vector<8xf32> to vector<1x8xf32>
    %195 = arith.mulf %191, %191 : vector<16x8xf32>
    %cst_77 = arith.constant dense<0.000000e+00> : vector<8xf32>
    %196 = vector.multi_reduction <add>, %195, %cst_77 [0] : vector<16x8xf32> to vector<8xf32>
    %197 = vector.shape_cast %196 : vector<8xf32> to vector<1x8xf32>
    %198 = arith.addf %194, %197 : vector<1x8xf32>
    %cst_78 = arith.constant 3.200000e+01 : f32
    %199 = vector.broadcast %cst_78 : f32 to vector<1x8xf32>
    %200 = arith.divf %198, %199 : vector<1x8xf32>
    %cst_79 = arith.constant 9.99999974E-6 : f32
    %201 = vector.broadcast %cst_79 : f32 to vector<1x8xf32>
    %202 = arith.addf %200, %201 : vector<1x8xf32>
    %203 = math.rsqrt %202 : vector<1x8xf32>
    %204 = arith.mulf %203, %179 : vector<1x8xf32>
    %205 = vector.broadcast %204 : vector<1x8xf32> to vector<16x8xf32>
    %206 = arith.mulf %189, %205 : vector<16x8xf32>
    %207 = vector.broadcast %180 : vector<1x8xf32> to vector<16x8xf32>
    %208 = arith.addf %206, %207 : vector<16x8xf32>
    %209 = vector.broadcast %204 : vector<1x8xf32> to vector<16x8xf32>
    %210 = arith.mulf %191, %209 : vector<16x8xf32>
    %211 = vector.broadcast %180 : vector<1x8xf32> to vector<16x8xf32>
    %212 = arith.addf %210, %211 : vector<16x8xf32>
    %cst_80 = arith.constant 2.000000e-01 : f32
    %213 = vector.broadcast %cst_80 : f32 to vector<16x8xf32>
    %214 = arith.mulf %213, %208 : vector<16x8xf32>
    %215 = arith.maximumf %208, %214 : vector<16x8xf32>
    %cst_81 = arith.constant 2.000000e-01 : f32
    %216 = vector.broadcast %cst_81 : f32 to vector<16x8xf32>
    %217 = arith.mulf %216, %212 : vector<16x8xf32>
    %218 = arith.maximumf %212, %217 : vector<16x8xf32>
    %219 = vector.extract_strided_slice %215 {offsets = [0, 0], sizes = [8, 8], strides = [1, 1]} : vector<16x8xf32> to vector<8x8xf32>
    %220 = vector.extract_strided_slice %218 {offsets = [0, 0], sizes = [8, 8], strides = [1, 1]} : vector<16x8xf32> to vector<8x8xf32>
    %221 = vector.extract_strided_slice %215 {offsets = [8, 0], sizes = [8, 8], strides = [1, 1]} : vector<16x8xf32> to vector<8x8xf32>
    %222 = vector.extract_strided_slice %218 {offsets = [8, 0], sizes = [8, 8], strides = [1, 1]} : vector<16x8xf32> to vector<8x8xf32>
    %223 = tpu.concatenate %219, %220, %221, %222 in 0 : vector<8x8xf32>, vector<8x8xf32>, vector<8x8xf32>, vector<8x8xf32> -> vector<32x8xf32>
    %224 = arith.truncf %223 : vector<32x8xf32> to vector<32x8xbf16>
    %cst_82 = arith.constant 0.000000e+00 : f32
    %225 = vector.broadcast %cst_82 : f32 to vector<8x8xf32>
    %226 = vector.extract_strided_slice %223 {offsets = [24, 0], sizes = [8, 8], strides = [1, 1]} : vector<32x8xf32> to vector<8x8xf32>
    %c1_i32_83 = arith.constant 1 : i32
    %227 = tpu.dynamic_rotate %226 by %c1_i32_83 dim 0 : vector<8x8xf32>, i32 -> vector<8x8xf32>
    %228 = vector.shape_cast %18 : vector<8x1xi1> to vector<8x1xi1>
    %229 = vector.broadcast %228 : vector<8x1xi1> to vector<8x8xi1>
    %230 = arith.select %229, %225, %227 : vector<8x8xi1>, vector<8x8xf32>
    %231 = arith.truncf %230 : vector<8x8xf32> to vector<8x8xbf16>
    %232 = vector.extract_strided_slice %223 {offsets = [0, 0], sizes = [8, 8], strides = [1, 1]} : vector<32x8xf32> to vector<8x8xf32>
    %c7_i32_84 = arith.constant 7 : i32
    %233 = tpu.dynamic_rotate %232 by %c7_i32_84 dim 0 : vector<8x8xf32>, i32 -> vector<8x8xf32>
    %234 = vector.shape_cast %36 : vector<8x1xi1> to vector<8x1xi1>
    %235 = vector.broadcast %234 : vector<8x1xi1> to vector<8x8xi1>
    %236 = arith.select %235, %225, %233 : vector<8x8xi1>, vector<8x8xf32>
    %237 = arith.truncf %236 : vector<8x8xf32> to vector<8x8xbf16>
    %238 = vector.extract_strided_slice %224 {offsets = [0, 0], sizes = [24, 8], strides = [1, 1]} : vector<32x8xbf16> to vector<24x8xbf16>
    %239 = tpu.concatenate %231, %238 in 0 : vector<8x8xbf16>, vector<24x8xbf16> -> vector<32x8xbf16>
    %240 = vector.extract_strided_slice %224 {offsets = [8, 0], sizes = [24, 8], strides = [1, 1]} : vector<32x8xbf16> to vector<24x8xbf16>
    %241 = tpu.concatenate %240, %237 in 0 : vector<24x8xbf16>, vector<8x8xbf16> -> vector<32x8xbf16>
    %242 = tpu.concatenate %224, %239 in 1 : vector<32x8xbf16>, vector<32x8xbf16> -> vector<32x16xbf16>
    %243 = tpu.concatenate %224, %241 in 1 : vector<32x8xbf16>, vector<32x8xbf16> -> vector<32x16xbf16>
    %c0_85 = arith.constant 0 : index
    %c0_86 = arith.constant 0 : index
    %c0_87 = arith.constant 0 : index
    %244 = vector.load %arg13[%c0_85, %c0_86, %c0_87] : memref<2x16x128xbf16, #tpu.memory_space<vmem>>, vector<1x16x128xbf16>
    %245 = vector.shape_cast %244 : vector<1x16x128xbf16> to vector<16x128xbf16>
    %cst_88 = arith.constant dense<0.000000e+00> : vector<32x128xf32>
    %246 = tpu.matmul %242, %245, %cst_88 {dimension_numbers = #tpu.dot_dimension_numbers<[1], [0], [0], [1], [0, 0, 1, 1], [], []>} : vector<32x16xbf16>, vector<16x128xbf16>, vector<32x128xf32> -> vector<32x128xf32>
    %c1_89 = arith.constant 1 : index
    %c0_90 = arith.constant 0 : index
    %c0_91 = arith.constant 0 : index
    %247 = vector.load %arg13[%c1_89, %c0_90, %c0_91] : memref<2x16x128xbf16, #tpu.memory_space<vmem>>, vector<1x16x128xbf16>
    %248 = vector.shape_cast %247 : vector<1x16x128xbf16> to vector<16x128xbf16>
    %cst_92 = arith.constant dense<0.000000e+00> : vector<32x128xf32>
    %249 = tpu.matmul %243, %248, %cst_92 {dimension_numbers = #tpu.dot_dimension_numbers<[1], [0], [0], [1], [0, 0, 1, 1], [], []>} : vector<32x16xbf16>, vector<16x128xbf16>, vector<32x128xf32> -> vector<32x128xf32>
    %250 = vector.extract_strided_slice %246 {offsets = [0, 0], sizes = [8, 128], strides = [1, 1]} : vector<32x128xf32> to vector<8x128xf32>
    %251 = arith.truncf %250 : vector<8x128xf32> to vector<8x128xbf16>
    %c0_93 = arith.constant 0 : index
    %c0_94 = arith.constant 0 : index
    %c0_95 = arith.constant 0 : index
    %252 = vector.load %arg14[%c0_93, %c0_94, %c0_95] : memref<8x8x128xbf16, #tpu.memory_space<vmem>>, vector<1x8x128xbf16>
    %253 = vector.shape_cast %252 : vector<1x8x128xbf16> to vector<8x128xbf16>
    %254 = vector.shape_cast %251 : vector<8x128xbf16> to vector<1x8x128xbf16>
    tpu.vector_store %arg14[%c0_93, %c0_94, %c0_95], %254 {strides = array<i32>} : memref<8x8x128xbf16, #tpu.memory_space<vmem>>, vector<1x8x128xbf16>,
    %255 = vector.extract_strided_slice %249 {offsets = [0, 0], sizes = [8, 128], strides = [1, 1]} : vector<32x128xf32> to vector<8x128xf32>
    %256 = arith.truncf %255 : vector<8x128xf32> to vector<8x128xbf16>
    %c1_96 = arith.constant 1 : index
    %c0_97 = arith.constant 0 : index
    %c0_98 = arith.constant 0 : index
    %257 = vector.load %arg14[%c1_96, %c0_97, %c0_98] : memref<8x8x128xbf16, #tpu.memory_space<vmem>>, vector<1x8x128xbf16>
    %258 = vector.shape_cast %257 : vector<1x8x128xbf16> to vector<8x128xbf16>
    %259 = vector.shape_cast %256 : vector<8x128xbf16> to vector<1x8x128xbf16>
    tpu.vector_store %arg14[%c1_96, %c0_97, %c0_98], %259 {strides = array<i32>} : memref<8x8x128xbf16, #tpu.memory_space<vmem>>, vector<1x8x128xbf16>,
    %260 = vector.extract_strided_slice %246 {offsets = [8, 0], sizes = [8, 128], strides = [1, 1]} : vector<32x128xf32> to vector<8x128xf32>
    %261 = arith.truncf %260 : vector<8x128xf32> to vector<8x128xbf16>
    %c2 = arith.constant 2 : index
    %c0_99 = arith.constant 0 : index
    %c0_100 = arith.constant 0 : index
    %262 = vector.load %arg14[%c2, %c0_99, %c0_100] : memref<8x8x128xbf16, #tpu.memory_space<vmem>>, vector<1x8x128xbf16>
    %263 = vector.shape_cast %262 : vector<1x8x128xbf16> to vector<8x128xbf16>
    %264 = vector.shape_cast %261 : vector<8x128xbf16> to vector<1x8x128xbf16>
    tpu.vector_store %arg14[%c2, %c0_99, %c0_100], %264 {strides = array<i32>} : memref<8x8x128xbf16, #tpu.memory_space<vmem>>, vector<1x8x128xbf16>,
    %265 = vector.extract_strided_slice %249 {offsets = [8, 0], sizes = [8, 128], strides = [1, 1]} : vector<32x128xf32> to vector<8x128xf32>
    %266 = arith.truncf %265 : vector<8x128xf32> to vector<8x128xbf16>
    %c3 = arith.constant 3 : index
    %c0_101 = arith.constant 0 : index
    %c0_102 = arith.constant 0 : index
    %267 = vector.load %arg14[%c3, %c0_101, %c0_102] : memref<8x8x128xbf16, #tpu.memory_space<vmem>>, vector<1x8x128xbf16>
    %268 = vector.shape_cast %267 : vector<1x8x128xbf16> to vector<8x128xbf16>
    %269 = vector.shape_cast %266 : vector<8x128xbf16> to vector<1x8x128xbf16>
    tpu.vector_store %arg14[%c3, %c0_101, %c0_102], %269 {strides = array<i32>} : memref<8x8x128xbf16, #tpu.memory_space<vmem>>, vector<1x8x128xbf16>,
    %270 = vector.extract_strided_slice %246 {offsets = [16, 0], sizes = [8, 128], strides = [1, 1]} : vector<32x128xf32> to vector<8x128xf32>
    %271 = arith.truncf %270 : vector<8x128xf32> to vector<8x128xbf16>
    %c4 = arith.constant 4 : index
    %c0_103 = arith.constant 0 : index
    %c0_104 = arith.constant 0 : index
    %272 = vector.load %arg14[%c4, %c0_103, %c0_104] : memref<8x8x128xbf16, #tpu.memory_space<vmem>>, vector<1x8x128xbf16>
    %273 = vector.shape_cast %272 : vector<1x8x128xbf16> to vector<8x128xbf16>
    %274 = vector.shape_cast %271 : vector<8x128xbf16> to vector<1x8x128xbf16>
    tpu.vector_store %arg14[%c4, %c0_103, %c0_104], %274 {strides = array<i32>} : memref<8x8x128xbf16, #tpu.memory_space<vmem>>, vector<1x8x128xbf16>,
    %275 = vector.extract_strided_slice %249 {offsets = [16, 0], sizes = [8, 128], strides = [1, 1]} : vector<32x128xf32> to vector<8x128xf32>
    %276 = arith.truncf %275 : vector<8x128xf32> to vector<8x128xbf16>
    %c5 = arith.constant 5 : index
    %c0_105 = arith.constant 0 : index
    %c0_106 = arith.constant 0 : index
    %277 = vector.load %arg14[%c5, %c0_105, %c0_106] : memref<8x8x128xbf16, #tpu.memory_space<vmem>>, vector<1x8x128xbf16>
    %278 = vector.shape_cast %277 : vector<1x8x128xbf16> to vector<8x128xbf16>
    %279 = vector.shape_cast %276 : vector<8x128xbf16> to vector<1x8x128xbf16>
    tpu.vector_store %arg14[%c5, %c0_105, %c0_106], %279 {strides = array<i32>} : memref<8x8x128xbf16, #tpu.memory_space<vmem>>, vector<1x8x128xbf16>,
    %280 = vector.extract_strided_slice %246 {offsets = [24, 0], sizes = [8, 128], strides = [1, 1]} : vector<32x128xf32> to vector<8x128xf32>
    %281 = arith.truncf %280 : vector<8x128xf32> to vector<8x128xbf16>
    %c6 = arith.constant 6 : index
    %c0_107 = arith.constant 0 : index
    %c0_108 = arith.constant 0 : index
    %282 = vector.load %arg14[%c6, %c0_107, %c0_108] : memref<8x8x128xbf16, #tpu.memory_space<vmem>>, vector<1x8x128xbf16>
    %283 = vector.shape_cast %282 : vector<1x8x128xbf16> to vector<8x128xbf16>
    %284 = vector.shape_cast %281 : vector<8x128xbf16> to vector<1x8x128xbf16>
    tpu.vector_store %arg14[%c6, %c0_107, %c0_108], %284 {strides = array<i32>} : memref<8x8x128xbf16, #tpu.memory_space<vmem>>, vector<1x8x128xbf16>,
    %285 = vector.extract_strided_slice %249 {offsets = [24, 0], sizes = [8, 128], strides = [1, 1]} : vector<32x128xf32> to vector<8x128xf32>
    %286 = arith.truncf %285 : vector<8x128xf32> to vector<8x128xbf16>
    %c7 = arith.constant 7 : index
    %c0_109 = arith.constant 0 : index
    %c0_110 = arith.constant 0 : index
    %287 = vector.load %arg14[%c7, %c0_109, %c0_110] : memref<8x8x128xbf16, #tpu.memory_space<vmem>>, vector<1x8x128xbf16>
    %288 = vector.shape_cast %287 : vector<1x8x128xbf16> to vector<8x128xbf16>
    %289 = vector.shape_cast %286 : vector<8x128xbf16> to vector<1x8x128xbf16>
    tpu.vector_store %arg14[%c7, %c0_109, %c0_110], %289 {strides = array<i32>} : memref<8x8x128xbf16, #tpu.memory_space<vmem>>, vector<1x8x128xbf16>,
    return
  }
}

module attributes {stable_mosaic.version = 11 : i64} {
  func.func @vocab_proj_kernel(%arg0: i32, %arg1: i32, %arg2: memref<1x8x128xbf16, #tpu.memory_space<vmem>>, %arg3: memref<128x256xbf16, #tpu.memory_space<vmem>>, %arg4: memref<1x256xf32, #tpu.memory_space<vmem>>, %arg5: memref<8x256xf32, #tpu.memory_space<vmem>>) attributes {dimension_semantics = [#tpu.dimension_semantics<parallel>, #tpu.dimension_semantics<parallel>], iteration_bounds = array<i64: 1, 8>, scalar_prefetch = 0 : i64, scratch_operands = 0 : i64, tpu.core_type = #tpu.core_type<tc>, window_params = [{transform_indices = @transform_0, window_bounds = array<i64: 1, 8, 128>}, {transform_indices = @transform_1, window_bounds = array<i64: 128, 256>}, {transform_indices = @transform_2, window_bounds = array<i64: 1, 256>}, {transform_indices = @transform_3, window_bounds = array<i64: 8, 256>}]} {
    %c0 = arith.constant 0 : index
    %c0_0 = arith.constant 0 : index
    %c0_1 = arith.constant 0 : index
    %0 = vector.load %arg2[%c0, %c0_0, %c0_1] : memref<1x8x128xbf16, #tpu.memory_space<vmem>>, vector<1x8x128xbf16>
    %1 = vector.shape_cast %0 : vector<1x8x128xbf16> to vector<8x128xbf16>
    %c0_2 = arith.constant 0 : index
    %c0_3 = arith.constant 0 : index
    %2 = vector.load %arg3[%c0_2, %c0_3] : memref<128x256xbf16, #tpu.memory_space<vmem>>, vector<128x256xbf16>
    %cst = arith.constant dense<0.000000e+00> : vector<8x256xf32>
    %3 = tpu.matmul %1, %2, %cst {dimension_numbers = #tpu.dot_dimension_numbers<[1], [0], [0], [1], [0, 0, 1, 1], [], []>} : vector<8x128xbf16>, vector<128x256xbf16>, vector<8x256xf32> -> vector<8x256xf32>
    %c0_4 = arith.constant 0 : index
    %c0_5 = arith.constant 0 : index
    %4 = vector.load %arg4[%c0_4, %c0_5] : memref<1x256xf32, #tpu.memory_space<vmem>>, vector<1x256xf32>
    %5 = vector.broadcast %4 : vector<1x256xf32> to vector<8x256xf32>
    %6 = arith.addf %3, %5 : vector<8x256xf32>
    %c0_6 = arith.constant 0 : index
    %c0_7 = arith.constant 0 : index
    %7 = vector.load %arg5[%c0_6, %c0_7] : memref<8x256xf32, #tpu.memory_space<vmem>>, vector<8x256xf32>
    tpu.vector_store %arg5[%c0_6, %c0_7], %6 {strides = array<i32>} : memref<8x256xf32, #tpu.memory_space<vmem>>, vector<8x256xf32>,
    return
  }
  func.func @transform_0(%arg0: i32, %arg1: i32) -> (i32, i32, i32) {
    %c0_i32 = arith.constant 0 : i32
    %c0_i32_0 = arith.constant 0 : i32
    %c0_i32_1 = arith.constant 0 : i32
    return %arg1, %c0_i32, %c0_i32_0 : i32, i32, i32
  }
  func.func @transform_1(%arg0: i32, %arg1: i32) -> (i32, i32) {
    %c0_i32 = arith.constant 0 : i32
    %c0_i32_0 = arith.constant 0 : i32
    return %c0_i32, %arg0 : i32, i32
  }
  func.func @transform_2(%arg0: i32, %arg1: i32) -> (i32, i32) {
    %c0_i32 = arith.constant 0 : i32
    %c0_i32_0 = arith.constant 0 : i32
    return %c0_i32, %arg0 : i32, i32
  }
  func.func @transform_3(%arg0: i32, %arg1: i32) -> (i32, i32) {
    %c1_i32 = arith.constant 1 : i32
    %0 = arith.muli %arg1, %c1_i32 : i32
    %1 = arith.addi %0, %arg0 : i32
    %c0_i32 = arith.constant 0 : i32
    %c0_i32_0 = arith.constant 0 : i32
    return %c0_i32, %1 : i32, i32
  }
}

</mosaic_0001>

<llo_original>
// kernel: cub_sent_decoder_map.3
$region0: #{cub_sent_decoder_map.3}
  #allocation0 [shape = 'u32[]', space=smem, size = 0x4, offset = 0x4, fixed_abs, tag = 'smem constant byte address 0x4 - core index']
  #allocation1 [shape = 'u32[144,128]{1,0:T(1,128)}', space=vmem, size = 0x12000, scoped, tag = 'internal scratch']
  %s0 = inlined_call_operand.vmem [shape: bf16[8,8,128], index: 0, kind: input, shape index: {}]
  %s1 = inlined_call_operand.vmem [shape: bf16[128,256], index: 1, kind: input, shape index: {}]
  %s2 = inlined_call_operand.vmem [shape: f32[1,256], index: 2, kind: input, shape index: {}]
  %s3 = inlined_call_operand.vmem [shape: f32[8,2048], index: 3, kind: output, shape index: {}]
  %s4 = sld [smem:[#allocation0]]
  $region45: #{cub_sent_decoder_map.3} parent=0
    _
  %s6 = ssub.s32 1, %s4
  %s7 = scalar_select 0, %s6, %s4
  loop: start=0, step=1, limit=10
  $region2: #{cub_sent_decoder_map.3} parent=0 // loop_pre_header
    _
  $region3: #{cub_sent_decoder_map.3} parent=0 // loop_header
    %s9 = sphi 0, %s13
    %p10 = scmp.ge.s32.totalorder %s9, 10
    %s16 = sphi 0, %s28
    %s17 = sphi 0, %s24
    %s18 = sphi 0, %s16
    %s19 = sphi 0, %s17
    %s20 = sphi 0, %s18
    %s21 = sphi 0, %s19
    %s31 = sphi 0, %s33
    %s34 = sphi 0, %s31
    %s35 = sphi 0, %s34
    %s51 = sphi 0, %s35
    %s57 = sphi 0, %s59
    %s60 = sphi 0, %s57
    %s61 = sphi 0, %s60
    %s77 = sphi 0, %s61
    %s83 = sphi 0, %s85
    %s86 = sphi 0, %s83
    %s87 = sphi 0, %s86
    %s103 = sphi 0, %s87
    %s111 = sphi 0, %s113
    %s114 = sphi 0, %s111
    %s115 = sphi 0, %s114
    %s131 = sphi 0, %s115
  $region4: #{cub_sent_decoder_map.3} parent=0 // loop_header_branch
    %12 = sbr.rel (%p10) target = $region8
  $region5: #{cub_sent_decoder_map.3} parent=0 // loop_body
    %s14 = ssub.s32 %s9, 1
    %s15 = ssub.s32 %s9, 2
    %s22 = sadd.s32 1, %s17
    %p23 = scmp.ge.s32.totalorder %s22, 8
    %s24 = scalar_select %p23, 0, %s22
    %s25 = sadd.s32 1, %s16
    %s26 = scalar_select %p23, %s25, %s16
    %p27 = scmp.ge.s32.totalorder %s26, 1
    %s28 = scalar_select %p27, 0, %s26
    %s29 = ssub.s32 %s17, %s24
    %p30 = scmp.eq.s32.totalorder %s29, 0
    %s32 = sadd.s32 %s31, 1
    %s33 = scalar_select %p30, %s31, %s32
    %p36 = pneg %p30
    %p37 = scmp.eq.s32.totalorder %s9, 7
    %p38 = por %p36, %p37
    %p39 = scmp.ne.s32.totalorder %s31, %s34
    %p40 = scmp.eq.s32.totalorder %s9, 0
    %p41 = por %p39, %p40
    %p42 = scmp.ne.s32.totalorder %s31, %s34
    %p43 = scmp.eq.s32.totalorder %s14, 7
    %p44 = por %p42, %p43
    %p45 = scmp.ne.s32.totalorder %s34, %s35
    %p46 = scmp.eq.s32.totalorder %s14, 0
    %p47 = por %p45, %p46
    %p48 = scmp.ne.s32.totalorder %s34, %s35
    %p49 = scmp.eq.s32.totalorder %s15, 7
    %p50 = por %p48, %p49
    %p52 = scmp.ne.s32.totalorder %s35, %s51
    %p53 = scmp.eq.s32.totalorder %s15, 0
    %p54 = por %p52, %p53
    %s55 = ssub.s32 %s16, %s28
    %p56 = scmp.eq.s32.totalorder %s55, 0
    %s58 = sadd.s32 %s57, 1
    %s59 = scalar_select %p56, %s57, %s58
    %p62 = pneg %p56
    %p63 = scmp.eq.s32.totalorder %s9, 7
    %p64 = por %p62, %p63
    %p65 = scmp.ne.s32.totalorder %s57, %s60
    %p66 = scmp.eq.s32.totalorder %s9, 0
    %p67 = por %p65, %p66
    %p68 = scmp.ne.s32.totalorder %s57, %s60
    %p69 = scmp.eq.s32.totalorder %s14, 7
    %p70 = por %p68, %p69
    %p71 = scmp.ne.s32.totalorder %s60, %s61
    %p72 = scmp.eq.s32.totalorder %s14, 0
    %p73 = por %p71, %p72
    %p74 = scmp.ne.s32.totalorder %s60, %s61
    %p75 = scmp.eq.s32.totalorder %s15, 7
    %p76 = por %p74, %p75
    %p78 = scmp.ne.s32.totalorder %s61, %s77
    %p79 = scmp.eq.s32.totalorder %s15, 0
    %p80 = por %p78, %p79
    %s81 = ssub.s32 %s16, %s28
    %p82 = scmp.eq.s32.totalorder %s81, 0
    %s84 = sadd.s32 %s83, 1
    %s85 = scalar_select %p82, %s83, %s84
    %p88 = pneg %p82
    %p89 = scmp.eq.s32.totalorder %s9, 7
    %p90 = por %p88, %p89
    %p91 = scmp.ne.s32.totalorder %s83, %s86
    %p92 = scmp.eq.s32.totalorder %s9, 0
    %p93 = por %p91, %p92
    %p94 = scmp.ne.s32.totalorder %s83, %s86
    %p95 = scmp.eq.s32.totalorder %s14, 7
    %p96 = por %p94, %p95
    %p97 = scmp.ne.s32.totalorder %s86, %s87
    %p98 = scmp.eq.s32.totalorder %s14, 0
    %p99 = por %p97, %p98
    %p100 = scmp.ne.s32.totalorder %s86, %s87
    %p101 = scmp.eq.s32.totalorder %s15, 7
    %p102 = por %p100, %p101
    %p104 = scmp.ne.s32.totalorder %s87, %s103
    %p105 = scmp.eq.s32.totalorder %s15, 0
    %p106 = por %p104, %p105
    %s107 = sadd.s32 %s17, %s16
    %s108 = sadd.s32 %s24, %s28
    %s109 = ssub.s32 %s107, %s108
    %p110 = scmp.eq.s32.totalorder %s109, 0
    %s112 = sadd.s32 %s111, 1
    %s113 = scalar_select %p110, %s111, %s112
    %p116 = pneg %p110
    %p117 = scmp.eq.s32.totalorder %s9, 7
    %p118 = por %p116, %p117
    %p119 = scmp.ne.s32.totalorder %s111, %s114
    %p120 = scmp.eq.s32.totalorder %s9, 0
    %p121 = por %p119, %p120
    %p122 = scmp.ne.s32.totalorder %s111, %s114
    %p123 = scmp.eq.s32.totalorder %s14, 7
    %p124 = por %p122, %p123
    %p125 = scmp.ne.s32.totalorder %s114, %s115
    %p126 = scmp.eq.s32.totalorder %s14, 0
    %p127 = por %p125, %p126
    %p128 = scmp.ne.s32.totalorder %s114, %s115
    %p129 = scmp.eq.s32.totalorder %s15, 7
    %p130 = por %p128, %p129
    %p132 = scmp.ne.s32.totalorder %s115, %s131
    %p133 = scmp.eq.s32.totalorder %s15, 0
    %p134 = por %p132, %p133
    %p135 = scmp.le.s32.totalorder 1, %s9
    %p136 = scmp.lt.s32.totalorder %s9, 9
    %p137 = pnand %p135, %p136
    %p138 = pneg %p137
    // Predicated region
    $region9: #{cub_sent_decoder_map.3} parent=5 // pred_check
      _
    $region10: #{cub_sent_decoder_map.3} parent=5 // pred_check_branch
      %140 = sbr.rel (%p137) target = $region12
    $region11: #{cub_sent_decoder_map.3} parent=5 // pred_region
      %s141 = ssub.s32 %s9, 1
      // Predicated region
      $region13: #{cub_sent_decoder_map.3} parent=11 // pred_check
        %p142 = pneg %p73
      $region14: #{cub_sent_decoder_map.3} parent=11 // pred_check_branch
        %144 = sbr.rel (%p142) target = $region16
      $region15: #{cub_sent_decoder_map.3} parent=11 // pred_region
        %s145 = smul.u32 2, %s18
        %p146 = scmp.lt.s32.totalorder %s145, 1
        %s147 = scalar_select %p146, %s145, 1
        %s148 = smul.addr %s147, 4
        %s149 = scalar_lea.vmem %s1, %s148
        %s150 = smul.u32 2, %s18
      $region16: #{cub_sent_decoder_map.3} parent=11 // pred_fallthru
        _
      // Predicated region
      $region17: #{cub_sent_decoder_map.3} parent=11 // pred_check
        %p151 = pneg %p99
      $region18: #{cub_sent_decoder_map.3} parent=11 // pred_check_branch
        %153 = sbr.rel (%p151) target = $region20
      $region19: #{cub_sent_decoder_map.3} parent=11 // pred_region
        %s154 = smul.u32 2, %s18
        %p155 = scmp.lt.s32.totalorder %s154, 1
        %s156 = scalar_select %p155, %s154, 1
        %s157 = scalar_lea.vmem %s2, %s156
        %s158 = smul.u32 2, %s18
      $region20: #{cub_sent_decoder_map.3} parent=11 // pred_fallthru
        _
    $region12: #{cub_sent_decoder_map.3} parent=5 // pred_fallthru
      _
    %p159 = scmp.lt.s32.totalorder %s9, 8
    // Predicated region
    $region21: #{cub_sent_decoder_map.3} parent=5 // pred_check
      %p160 = pneg %p159
    $region22: #{cub_sent_decoder_map.3} parent=5 // pred_check_branch
      %162 = sbr.rel (%p160) target = $region24
    $region23: #{cub_sent_decoder_map.3} parent=5 // pred_region
      // Predicated region
      $region25: #{cub_sent_decoder_map.3} parent=23 // pred_check
        %p163 = pneg %p41
      $region26: #{cub_sent_decoder_map.3} parent=23 // pred_check_branch
        %165 = sbr.rel (%p163) target = $region28
      $region27: #{cub_sent_decoder_map.3} parent=23 // pred_region
        %p166 = scmp.lt.s32.totalorder %s17, 7
        %s167 = scalar_select %p166, %s17, 7
        %s168 = smul.addr %s167, 4
        %s169 = scalar_lea.vmem %s0, %s168
      $region28: #{cub_sent_decoder_map.3} parent=23 // pred_fallthru
        _
    $region24: #{cub_sent_decoder_map.3} parent=5 // pred_fallthru
      _
    %p170 = scmp.le.s32.totalorder 1, %s9
    %p171 = scmp.lt.s32.totalorder %s9, 9
    %p172 = pnand %p170, %p171
    %p173 = pneg %p172
    // Predicated region
    $region29: #{cub_sent_decoder_map.3} parent=5 // pred_check
      _
    $region30: #{cub_sent_decoder_map.3} parent=5 // pred_check_branch
      %175 = sbr.rel (%p172) target = $region32
    $region31: #{cub_sent_decoder_map.3} parent=5 // pred_region
      %s176 = ssub.s32 %s9, 1
      %p177 = scmp.lt.s32.totalorder %s19, 7
      %s178 = scalar_select %p177, %s19, 7
      %s179 = smul.addr %s178, 4
      %s180 = scalar_lea.vmem %s0, %s179
      %p181 = pneg %p47
      %p182 = pneg %p44
      %s183 = smul.u32 2, %s18
      %p184 = scmp.lt.s32.totalorder %s183, 1
      %s185 = scalar_select %p184, %s183, 1
      %s186 = smul.addr %s185, 4
      %s187 = scalar_lea.vmem %s1, %s186
      %p188 = pneg %p73
      %p189 = pneg %p70
      %s190 = smul.u32 2, %s18
      %p191 = scmp.lt.s32.totalorder %s190, 1
      %s192 = scalar_select %p191, %s190, 1
      %s193 = scalar_lea.vmem %s2, %s192
      %p194 = pneg %p99
      %p195 = pneg %p96
      %p196 = pneg %p127
      %p197 = pneg %p124
      %s198 = sadd.s32 %s19, %s18
      %s199 = smul.u32 2, %s198
      %p200 = scmp.lt.s32.totalorder %s199, 15
      %s201 = scalar_select %p200, %s199, 15
      %s202 = smul.addr %s201, 8
      %s203 = scalar_lea.vmem %s3, %s202
      %p204 = scmp.lt.s32.totalorder %s19, 7
      %s205 = scalar_select %p204, %s19, 7
      %s206 = smul.addr %s205, 4
      %s207 = scalar_lea.vmem %s0, %s206
      %s208 = smul.u32 2, %s18
      %p209 = scmp.lt.s32.totalorder %s208, 1
      %s210 = scalar_select %p209, %s208, 1
      %s211 = smul.addr %s210, 4
      %s212 = scalar_lea.vmem %s1, %s211
      %s213 = smul.u32 2, %s18
      %s214 = smul.u32 2, %s18
      %p215 = scmp.lt.s32.totalorder %s214, 1
      %s216 = scalar_select %p215, %s214, 1
      %s217 = scalar_lea.vmem %s2, %s216
      %s218 = smul.u32 2, %s18
      %s219 = sadd.s32 %s19, %s18
      %s220 = smul.u32 2, %s219
      %p221 = scmp.lt.s32.totalorder %s220, 15
      %s222 = scalar_select %p221, %s220, 15
      %s223 = smul.addr %s222, 8
      %s224 = scalar_lea.vmem %s3, %s223
      %s225 = sadd.s32 %s19, %s18
      %s226 = smul.u32 2, %s225
      %v228 = vld [vmem:[%s207] sm:$0xf]
      %v229 = vld [vmem:[%s212] sm:$0xff]
      %v230 = vld [vmem:[%s212 + $0x8] sm:$0xff]
      %v231 = vld [vmem:[%s212 + $0x10] sm:$0xff]
      %v232 = vld [vmem:[%s212 + $0x18] sm:$0xff]
      %v233 = vld [vmem:[%s212 + $0x20] sm:$0xff]
      %v234 = vld [vmem:[%s212 + $0x28] sm:$0xff]
      %v235 = vld [vmem:[%s212 + $0x30] sm:$0xff]
      %v236 = vld [vmem:[%s212 + $0x38] sm:$0xff]
      %v237 = vld [vmem:[%s212 + $0x40] sm:$0xff]
      %v238 = vld [vmem:[%s212 + $0x48] sm:$0xff]
      %v239 = vld [vmem:[%s212 + $0x50] sm:$0xff]
      %v240 = vld [vmem:[%s212 + $0x58] sm:$0xff]
      %v241 = vld [vmem:[%s212 + $0x60] sm:$0xff]
      %v242 = vld [vmem:[%s212 + $0x68] sm:$0xff]
      %v243 = vld [vmem:[%s212 + $0x70] sm:$0xff]
      %v244 = vld [vmem:[%s212 + $0x78] sm:$0xff]
      %v245 = vld [vmem:[%s217] sm:$0x3]
      %v247 = vlaneseq
      %v248 = vshrl.u32 %v247, 7
      %v249 = vsub.s32 0, %v248
      %v250 = vrot.slane %v245, %v249
      %v251 = vlaneseq
      %v252 = vshrl.u32 %v251, 7
      %v253 = vsub.s32 1, %v252
      %v254 = vrot.slane %v245, %v253
      %v273 = vunpack.c.l.b16 %v229
      %v274 = vunpack.c.h.b16 %v229
      %v275 = vunpack.c.l.b16 %v230
      %v276 = vunpack.c.h.b16 %v230
      %v277 = vunpack.c.l.b16 %v231
      %v278 = vunpack.c.h.b16 %v231
      %v279 = vunpack.c.l.b16 %v232
      %v280 = vunpack.c.h.b16 %v232
      %v281 = vunpack.c.l.b16 %v233
      %v282 = vunpack.c.h.b16 %v233
      %v283 = vunpack.c.l.b16 %v234
      %v284 = vunpack.c.h.b16 %v234
      %v285 = vunpack.c.l.b16 %v235
      %v286 = vunpack.c.h.b16 %v235
      %v287 = vunpack.c.l.b16 %v236
      %v288 = vunpack.c.h.b16 %v236
      %v289 = vunpack.c.l.b16 %v237
      %v290 = vunpack.c.h.b16 %v237
      %v291 = vunpack.c.l.b16 %v238
      %v292 = vunpack.c.h.b16 %v238
      %v293 = vunpack.c.l.b16 %v239
      %v294 = vunpack.c.h.b16 %v239
      %v295 = vunpack.c.l.b16 %v240
      %v296 = vunpack.c.h.b16 %v240
      %v297 = vunpack.c.l.b16 %v241
      %v298 = vunpack.c.h.b16 %v241
      %v299 = vunpack.c.l.b16 %v242
      %v300 = vunpack.c.h.b16 %v242
      %v301 = vunpack.c.l.b16 %v243
      %v302 = vunpack.c.h.b16 %v243
      %v303 = vunpack.c.l.b16 %v244
      %v304 = vunpack.c.h.b16 %v244
      %v305 = vpack.c.b16 %v275, %v273
      %v306 = vpack.c.b16 %v276, %v274
      %v307 = vpack.c.b16 %v279, %v277
      %v308 = vpack.c.b16 %v280, %v278
      %v309 = vpack.c.b16 %v283, %v281
      %v310 = vpack.c.b16 %v284, %v282
      %v311 = vpack.c.b16 %v287, %v285
      %v312 = vpack.c.b16 %v288, %v286
      %v313 = vpack.c.b16 %v291, %v289
      %v314 = vpack.c.b16 %v292, %v290
      %v315 = vpack.c.b16 %v295, %v293
      %v316 = vpack.c.b16 %v296, %v294
      %v317 = vpack.c.b16 %v299, %v297
      %v318 = vpack.c.b16 %v300, %v298
      %v319 = vpack.c.b16 %v303, %v301
      %v320 = vpack.c.b16 %v304, %v302
      %337 = vmatprep.subr.bf16.mxu0 %v320
      %338 = vmatpush1.bf16.msra.mxu0 %v319
      %339 = vmatprep.subr.bf16.mxu0 %v318
      %340 = vmatpush1.bf16.msra.mxu0 %v317
      %341 = vmatprep.subr.bf16.mxu0 %v316
      %342 = vmatpush1.bf16.msra.mxu0 %v315
      %343 = vmatprep.subr.bf16.mxu0 %v314
      %344 = vmatpush1.bf16.msra.mxu0 %v313
      %345 = vmatprep.subr.bf16.mxu0 %v312
      %346 = vmatpush1.bf16.msra.mxu0 %v311
      %347 = vmatprep.subr.bf16.mxu0 %v310
      %348 = vmatpush1.bf16.msra.mxu0 %v309
      %349 = vmatprep.subr.bf16.mxu0 %v308
      %350 = vmatpush1.bf16.msra.mxu0 %v307
      %351 = vmatprep.subr.bf16.mxu0 %v306
      %352 = vmatpush1.bf16.msra.mxu0 %v305
      %353 = vmatprep.subr.bf16.mxu0 0
      %354 = vmatpush2.bf16.msra.mxu0 0
      %355 = vmatprep.subr.bf16.mxu0 0
      %356 = vmatpush2.bf16.msra.mxu0 0
      %357 = vmatprep.subr.bf16.mxu0 0
      %358 = vmatpush2.bf16.msra.mxu0 0
      %359 = vmatprep.subr.bf16.mxu0 0
      %360 = vmatpush2.bf16.msra.mxu0 0
      %361 = vmatprep.subr.bf16.mxu0 0
      %362 = vmatpush2.bf16.msra.mxu0 0
      %363 = vmatprep.subr.bf16.mxu0 0
      %364 = vmatpush2.bf16.msra.mxu0 0
      %365 = vmatprep.subr.bf16.mxu0 0
      %366 = vmatpush2.bf16.msra.mxu0 0
      %367 = vmatprep.subr.bf16.mxu0 0
      %368 = vmatpush2.bf16.msra.mxu0 0
      %369 = vmatprep.mubr.bf16.mxu0 0
      %370 = vmatmul.mubr.bf16.gmra.mxu0 %v228
      %v371 = vpop.f32.mrf.mxu0
      %v372 = vadd.f32 %v250, %v371
      %v373 = vpop.f32.mrf.mxu0
      %v374 = vadd.f32 %v254, %v373
      %v375 = vpop.f32.mrf.mxu0
      %v376 = vpop.f32.mrf.mxu0
      %377 = vdwg.mxu0
      %378 = vst [vmem:[%s224] sm:$0xff] %v372
      %379 = vst [vmem:[%s224 + $0x8] sm:$0xff] %v374
      %s380 = sadd.s32 %s19, %s18
      %s381 = smul.u32 2, %s380
      %p382 = scmp.lt.s32.totalorder %s381, 15
      %s383 = scalar_select %p382, %s381, 15
      %s384 = smul.addr %s383, 8
      %s385 = scalar_lea.vmem %s3, %s384
      // Predicated region
      $region33: #{cub_sent_decoder_map.3} parent=31 // pred_check
        %p386 = pneg %p124
      $region34: #{cub_sent_decoder_map.3} parent=31 // pred_check_branch
        %388 = sbr.rel (%p386) target = $region36
      $region35: #{cub_sent_decoder_map.3} parent=31 // pred_region
        %s389 = sadd.s32 %s19, %s18
        %s390 = smul.u32 2, %s389
      $region36: #{cub_sent_decoder_map.3} parent=31 // pred_fallthru
        _
    $region32: #{cub_sent_decoder_map.3} parent=5 // pred_fallthru
      _
    %p391 = scmp.le.s32.totalorder 2, %s9
    // Predicated region
    $region37: #{cub_sent_decoder_map.3} parent=5 // pred_check
      %p392 = pneg %p391
    $region38: #{cub_sent_decoder_map.3} parent=5 // pred_check_branch
      %394 = sbr.rel (%p392) target = $region40
    $region39: #{cub_sent_decoder_map.3} parent=5 // pred_region
      %s395 = ssub.s32 %s9, 2
      // Predicated region
      $region41: #{cub_sent_decoder_map.3} parent=39 // pred_check
        %p396 = pneg %p130
      $region42: #{cub_sent_decoder_map.3} parent=39 // pred_check_branch
        %398 = sbr.rel (%p396) target = $region44
      $region43: #{cub_sent_decoder_map.3} parent=39 // pred_region
        %s399 = sadd.s32 %s21, %s20
        %s400 = smul.u32 2, %s399
        %p401 = scmp.lt.s32.totalorder %s400, 15
        %s402 = scalar_select %p401, %s400, 15
        %s403 = smul.addr %s402, 8
        %s404 = scalar_lea.vmem %s3, %s403
      $region44: #{cub_sent_decoder_map.3} parent=39 // pred_fallthru
        _
    $region40: #{cub_sent_decoder_map.3} parent=5 // pred_fallthru
      _
  $region6: #{cub_sent_decoder_map.3} parent=0 // loop_footer
    %s13 = sadd.s32 1, %s9
  $region7: #{cub_sent_decoder_map.3} parent=0 // loop_footer_branch
    %8 = sbr.rel target = $region3
  $region8: #{cub_sent_decoder_map.3} parent=0 // loop_exit
    _

// kernel: cub_sent_decoder_map.2
$region0: #{cub_sent_decoder_map.2}
  #allocation0 [shape = 'u32[]', space=smem, size = 0x4, offset = 0x4, fixed_abs, tag = 'smem constant byte address 0x4 - core index']
  #allocation1 [shape = 'u32[144,128]{1,0:T(1,128)}', space=vmem, size = 0x12000, scoped, tag = 'internal scratch']
  %s0 = inlined_call_operand.vmem [shape: f32[8,128], index: 0, kind: input, shape index: {}]
  %s1 = inlined_call_operand.vmem [shape: bf16[128,64], index: 1, kind: input, shape index: {}]
  %s2 = inlined_call_operand.vmem [shape: f32[1,64], index: 2, kind: input, shape index: {}]
  %s3 = inlined_call_operand.vmem [shape: f32[1,64], index: 3, kind: input, shape index: {}]
  %s4 = inlined_call_operand.vmem [shape: bf16[64,32], index: 4, kind: input, shape index: {}]
  %s5 = inlined_call_operand.vmem [shape: f32[1,32], index: 5, kind: input, shape index: {}]
  %s6 = inlined_call_operand.vmem [shape: f32[1,32], index: 6, kind: input, shape index: {}]
  %s7 = inlined_call_operand.vmem [shape: bf16[2,64,16], index: 7, kind: input, shape index: {}]
  %s8 = inlined_call_operand.vmem [shape: f32[1,16], index: 8, kind: input, shape index: {}]
  %s9 = inlined_call_operand.vmem [shape: f32[1,16], index: 9, kind: input, shape index: {}]
  %s10 = inlined_call_operand.vmem [shape: bf16[2,32,8], index: 10, kind: input, shape index: {}]
  %s11 = inlined_call_operand.vmem [shape: f32[1,8], index: 11, kind: input, shape index: {}]
  %s12 = inlined_call_operand.vmem [shape: f32[1,8], index: 12, kind: input, shape index: {}]
  %s13 = inlined_call_operand.vmem [shape: bf16[2,16,128], index: 13, kind: input, shape index: {}]
  %s14 = inlined_call_operand.vmem [shape: bf16[8,8,128], index: 14, kind: output, shape index: {}]
  %s15 = sld [smem:[#allocation0]]
  $region66: #{cub_sent_decoder_map.2} parent=0
    _
  %s17 = ssub.s32 1, %s15
  %s18 = scalar_select 0, %s17, %s15
  // Predicated region
  $region2: #{cub_sent_decoder_map.2} parent=0 // pred_check
    _
  $region3: #{cub_sent_decoder_map.2} parent=0 // pred_check_branch
    %20 = sbr.rel (0) target = $region5
  $region4: #{cub_sent_decoder_map.2} parent=0 // pred_region
    _
  $region5: #{cub_sent_decoder_map.2} parent=0 // pred_fallthru
    _
  // Predicated region
  $region6: #{cub_sent_decoder_map.2} parent=0 // pred_check
    _
  $region7: #{cub_sent_decoder_map.2} parent=0 // pred_check_branch
    %22 = sbr.rel (0) target = $region9
  $region8: #{cub_sent_decoder_map.2} parent=0 // pred_region
    _
  $region9: #{cub_sent_decoder_map.2} parent=0 // pred_fallthru
    _
  // Predicated region
  $region10: #{cub_sent_decoder_map.2} parent=0 // pred_check
    _
  $region11: #{cub_sent_decoder_map.2} parent=0 // pred_check_branch
    %24 = sbr.rel (0) target = $region13
  $region12: #{cub_sent_decoder_map.2} parent=0 // pred_region
    _
  $region13: #{cub_sent_decoder_map.2} parent=0 // pred_fallthru
    _
  // Predicated region
  $region14: #{cub_sent_decoder_map.2} parent=0 // pred_check
    _
  $region15: #{cub_sent_decoder_map.2} parent=0 // pred_check_branch
    %26 = sbr.rel (0) target = $region17
  $region16: #{cub_sent_decoder_map.2} parent=0 // pred_region
    _
  $region17: #{cub_sent_decoder_map.2} parent=0 // pred_fallthru
    _
  // Predicated region
  $region18: #{cub_sent_decoder_map.2} parent=0 // pred_check
    _
  $region19: #{cub_sent_decoder_map.2} parent=0 // pred_check_branch
    %28 = sbr.rel (0) target = $region21
  $region20: #{cub_sent_decoder_map.2} parent=0 // pred_region
    _
  $region21: #{cub_sent_decoder_map.2} parent=0 // pred_fallthru
    _
  // Predicated region
  $region22: #{cub_sent_decoder_map.2} parent=0 // pred_check
    _
  $region23: #{cub_sent_decoder_map.2} parent=0 // pred_check_branch
    %30 = sbr.rel (0) target = $region25
  $region24: #{cub_sent_decoder_map.2} parent=0 // pred_region
    _
  $region25: #{cub_sent_decoder_map.2} parent=0 // pred_fallthru
    _
  // Predicated region
  $region26: #{cub_sent_decoder_map.2} parent=0 // pred_check
    _
  $region27: #{cub_sent_decoder_map.2} parent=0 // pred_check_branch
    %32 = sbr.rel (0) target = $region29
  $region28: #{cub_sent_decoder_map.2} parent=0 // pred_region
    _
  $region29: #{cub_sent_decoder_map.2} parent=0 // pred_fallthru
    _
  // Predicated region
  $region30: #{cub_sent_decoder_map.2} parent=0 // pred_check
    _
  $region31: #{cub_sent_decoder_map.2} parent=0 // pred_check_branch
    %34 = sbr.rel (0) target = $region33
  $region32: #{cub_sent_decoder_map.2} parent=0 // pred_region
    _
  $region33: #{cub_sent_decoder_map.2} parent=0 // pred_fallthru
    _
  // Predicated region
  $region34: #{cub_sent_decoder_map.2} parent=0 // pred_check
    _
  $region35: #{cub_sent_decoder_map.2} parent=0 // pred_check_branch
    %36 = sbr.rel (0) target = $region37
  $region36: #{cub_sent_decoder_map.2} parent=0 // pred_region
    _
  $region37: #{cub_sent_decoder_map.2} parent=0 // pred_fallthru
    _
  // Predicated region
  $region38: #{cub_sent_decoder_map.2} parent=0 // pred_check
    _
  $region39: #{cub_sent_decoder_map.2} parent=0 // pred_check_branch
    %38 = sbr.rel (0) target = $region41
  $region40: #{cub_sent_decoder_map.2} parent=0 // pred_region
    _
  $region41: #{cub_sent_decoder_map.2} parent=0 // pred_fallthru
    _
  // Predicated region
  $region42: #{cub_sent_decoder_map.2} parent=0 // pred_check
    _
  $region43: #{cub_sent_decoder_map.2} parent=0 // pred_check_branch
    %40 = sbr.rel (0) target = $region45
  $region44: #{cub_sent_decoder_map.2} parent=0 // pred_region
    _
  $region45: #{cub_sent_decoder_map.2} parent=0 // pred_fallthru
    _
  // Predicated region
  $region46: #{cub_sent_decoder_map.2} parent=0 // pred_check
    _
  $region47: #{cub_sent_decoder_map.2} parent=0 // pred_check_branch
    %42 = sbr.rel (0) target = $region49
  $region48: #{cub_sent_decoder_map.2} parent=0 // pred_region
    _
  $region49: #{cub_sent_decoder_map.2} parent=0 // pred_fallthru
    _
  // Predicated region
  $region50: #{cub_sent_decoder_map.2} parent=0 // pred_check
    _
  $region51: #{cub_sent_decoder_map.2} parent=0 // pred_check_branch
    %44 = sbr.rel (0) target = $region53
  $region52: #{cub_sent_decoder_map.2} parent=0 // pred_region
    _
  $region53: #{cub_sent_decoder_map.2} parent=0 // pred_fallthru
    _
  // Predicated region
  $region54: #{cub_sent_decoder_map.2} parent=0 // pred_check
    _
  $region55: #{cub_sent_decoder_map.2} parent=0 // pred_check_branch
    %46 = sbr.rel (0) target = $region57
  $region56: #{cub_sent_decoder_map.2} parent=0 // pred_region
    _
  $region57: #{cub_sent_decoder_map.2} parent=0 // pred_fallthru
    _
  %v48 = vlaneseq
  %v49 = vshrl.u32 %v48, 7
  %vm50 = vcmp.lt.s32.totalorder %v49, 0
  %v51 = vsub.s32 0, %v49
  %v52 = vsel %vm50, %v51, %v49
  %v53 = vshrl.u32 %v52, 2
  %v54 = vand.u32 %v52, 3
  %v55 = vsub.s32 0, %v54
  %v56 = vsel %vm50, %v55, %v54
  %vm57 = vcmp.ne.s32.totalorder %v56, 0
  %vm58 = vcmp.lt.s32.totalorder %v56, 0
  %vm59 = vmand %vm58, %vm57
  %v60 = vadd.s32 %v56, 4
  %v61 = vsel %vm59, %v60, %v56
  %vm62 = vcmp.eq.s32.totalorder %v61, 0
  %vm63 = vcmp.eq.s32.totalorder %v61, 3
  %v64 = vld [vmem:[%s0] sm:$0xff]
  %v65 = vpack.c.bf16 %v64, %v64
  %v66 = vld [vmem:[%s1] sm:$0xf]
  %v67 = vld [vmem:[%s1 + $0x4] sm:$0xf]
  %v68 = vld [vmem:[%s1 + $0x8] sm:$0xf]
  %v69 = vld [vmem:[%s1 + $0xc] sm:$0xf]
  %v70 = vld [vmem:[%s1 + $0x10] sm:$0xf]
  %v71 = vld [vmem:[%s1 + $0x14] sm:$0xf]
  %v72 = vld [vmem:[%s1 + $0x18] sm:$0xf]
  %v73 = vld [vmem:[%s1 + $0x1c] sm:$0xf]
  %v74 = vld [vmem:[%s1 + $0x20] sm:$0xf]
  %v75 = vld [vmem:[%s1 + $0x24] sm:$0xf]
  %v76 = vld [vmem:[%s1 + $0x28] sm:$0xf]
  %v77 = vld [vmem:[%s1 + $0x2c] sm:$0xf]
  %v78 = vld [vmem:[%s1 + $0x30] sm:$0xf]
  %v79 = vld [vmem:[%s1 + $0x34] sm:$0xf]
  %v80 = vld [vmem:[%s1 + $0x38] sm:$0xf]
  %v81 = vld [vmem:[%s1 + $0x3c] sm:$0xf]
  %v98 = vunpack.c.l.b16 %v66
  %v99 = vunpack.c.l.b16 %v67
  %v100 = vunpack.c.l.b16 %v68
  %v101 = vunpack.c.l.b16 %v69
  %v102 = vunpack.c.l.b16 %v70
  %v103 = vunpack.c.l.b16 %v71
  %v104 = vunpack.c.l.b16 %v72
  %v105 = vunpack.c.l.b16 %v73
  %v106 = vunpack.c.l.b16 %v74
  %v107 = vunpack.c.l.b16 %v75
  %v108 = vunpack.c.l.b16 %v76
  %v109 = vunpack.c.l.b16 %v77
  %v110 = vunpack.c.l.b16 %v78
  %v111 = vunpack.c.l.b16 %v79
  %v112 = vunpack.c.l.b16 %v80
  %v113 = vunpack.c.l.b16 %v81
  %v114 = vpack.c.b16 %v99, %v98
  %v115 = vpack.c.b16 %v101, %v100
  %v116 = vpack.c.b16 %v103, %v102
  %v117 = vpack.c.b16 %v105, %v104
  %v118 = vpack.c.b16 %v107, %v106
  %v119 = vpack.c.b16 %v109, %v108
  %v120 = vpack.c.b16 %v111, %v110
  %v121 = vpack.c.b16 %v113, %v112
  %130 = vmatprep.subr.bf16.mxu0 0
  %131 = vmatpush1.bf16.msra.mxu0 %v121
  %132 = vmatprep.subr.bf16.mxu0 0
  %133 = vmatpush1.bf16.msra.mxu0 %v120
  %134 = vmatprep.subr.bf16.mxu0 0
  %135 = vmatpush1.bf16.msra.mxu0 %v119
  %136 = vmatprep.subr.bf16.mxu0 0
  %137 = vmatpush1.bf16.msra.mxu0 %v118
  %138 = vmatprep.subr.bf16.mxu0 0
  %139 = vmatpush1.bf16.msra.mxu0 %v117
  %140 = vmatprep.subr.bf16.mxu0 0
  %141 = vmatpush1.bf16.msra.mxu0 %v116
  %142 = vmatprep.subr.bf16.mxu0 0
  %143 = vmatpush1.bf16.msra.mxu0 %v115
  %144 = vmatprep.subr.bf16.mxu0 0
  %145 = vmatpush1.bf16.msra.mxu0 %v114
  %146 = vmatprep.subr.bf16.mxu0 0
  %147 = vmatpush2.bf16.msra.mxu0 0
  %148 = vmatprep.subr.bf16.mxu0 0
  %149 = vmatpush2.bf16.msra.mxu0 0
  %150 = vmatprep.subr.bf16.mxu0 0
  %151 = vmatpush2.bf16.msra.mxu0 0
  %152 = vmatprep.subr.bf16.mxu0 0
  %153 = vmatpush2.bf16.msra.mxu0 0
  %154 = vmatprep.subr.bf16.mxu0 0
  %155 = vmatpush2.bf16.msra.mxu0 0
  %156 = vmatprep.subr.bf16.mxu0 0
  %157 = vmatpush2.bf16.msra.mxu0 0
  %158 = vmatprep.subr.bf16.mxu0 0
  %159 = vmatpush2.bf16.msra.mxu0 0
  %160 = vmatprep.subr.bf16.mxu0 0
  %161 = vmatpush2.bf16.msra.mxu0 0
  %162 = vmatprep.mubr.bf16.mxu0 0
  %163 = vmatmul.mubr.bf16.gmra.mxu0 %v65
  %v164 = vpop.f32.mrf.mxu0
  %v165 = vadd.f32 0.0, %v164
  %v166 = vpop.f32.mrf.mxu0
  %v167 = vpop.f32.mrf.mxu0
  %v168 = vpop.f32.mrf.mxu0
  %169 = vdwg.mxu0
  %v170 = vld [vmem:[%s2] sm:$0x1]
  %v171 = vld [vmem:[%s3] sm:$0x1]
  %vm172 = vcmask 523264
  %v173 = vsel %vm172, %v165, 0.0
  %v174 = vrot.slane %v173, 4
  %v175 = vadd.f32 %v173, %v174
  %v176 = vrot.slane %v175, 2
  %v177 = vadd.f32 %v175, %v176
  %v178 = vrot.slane %v177, 1
  %v179 = vadd.f32 %v177, %v178
  %v180 = vrcp.pop 8.0
  %v181 = vmul.f32 %v179, %v180
  %v182 = vsub.f32 %v165, %v181
  %v183 = vmul.f32 %v182, %v182
  %v184 = vsel %vm172, %v183, 0.0
  %v185 = vrot.slane %v184, 4
  %v186 = vadd.f32 %v184, %v185
  %v187 = vrot.slane %v186, 2
  %v188 = vadd.f32 %v186, %v187
  %v189 = vrot.slane %v188, 1
  %v190 = vadd.f32 %v188, %v189
  %v191 = vmul.f32 %v190, %v180
  %v192 = vadd.f32 %v191, 1e-05
  %v193 = vrsqrt.pop %v192
  %v194 = vmul.f32 %v193, %v170
  %v195 = vlaneseq
  %v196 = vshrl.u32 %v195, 7
  %v197 = vsub.s32 0, %v196
  %v198 = vrot.slane %v194, %v197
  %v199 = vmul.f32 %v182, %v198
  %v201 = vlaneseq
  %v202 = vshrl.u32 %v201, 7
  %v203 = vsub.s32 0, %v202
  %v204 = vrot.slane %v171, %v203
  %v206 = vadd.f32 %v199, %v204
  %v207 = vmul.f32 %v206, 0.2
  %v208 = vmax.f32 %v206, %v207
  %v209 = vpack.c.bf16 %v208, %v208
  %v210 = vld [vmem:[%s4] sm:$0xf]
  %v211 = vld [vmem:[%s4 + $0x4] sm:$0xf]
  %v212 = vld [vmem:[%s4 + $0x8] sm:$0xf]
  %v213 = vld [vmem:[%s4 + $0xc] sm:$0xf]
  %v214 = vld [vmem:[%s4 + $0x10] sm:$0xf]
  %v215 = vld [vmem:[%s4 + $0x14] sm:$0xf]
  %v216 = vld [vmem:[%s4 + $0x18] sm:$0xf]
  %v217 = vld [vmem:[%s4 + $0x1c] sm:$0xf]
  %v226 = vunpack.c.l.b16 %v210
  %v227 = vunpack.c.l.b16 %v211
  %v228 = vunpack.c.l.b16 %v212
  %v229 = vunpack.c.l.b16 %v213
  %v230 = vunpack.c.l.b16 %v214
  %v231 = vunpack.c.l.b16 %v215
  %v232 = vunpack.c.l.b16 %v216
  %v233 = vunpack.c.l.b16 %v217
  %v234 = vpack.c.b16 %v227, %v226
  %v235 = vpack.c.b16 %v229, %v228
  %v236 = vpack.c.b16 %v231, %v230
  %v237 = vpack.c.b16 %v233, %v232
  %v243 = vsel %vm172, %v209, 0
  %245 = vmatprep.subr.bf16.mxu0 0
  %246 = vmatpush1.bf16.msra.mxu0 0
  %247 = vmatprep.subr.bf16.mxu0 0
  %248 = vmatpush1.bf16.msra.mxu0 0
  %249 = vmatprep.subr.bf16.mxu0 0
  %250 = vmatpush1.bf16.msra.mxu0 0
  %251 = vmatprep.subr.bf16.mxu0 0
  %252 = vmatpush1.bf16.msra.mxu0 0
  %253 = vmatprep.subr.bf16.mxu0 0
  %254 = vmatpush1.bf16.msra.mxu0 %v237
  %255 = vmatprep.subr.bf16.mxu0 0
  %256 = vmatpush1.bf16.msra.mxu0 %v236
  %257 = vmatprep.subr.bf16.mxu0 0
  %258 = vmatpush1.bf16.msra.mxu0 %v235
  %259 = vmatprep.subr.bf16.mxu0 0
  %260 = vmatpush1.bf16.msra.mxu0 %v234
  %261 = vmatprep.subr.bf16.mxu0 0
  %262 = vmatpush2.bf16.msra.mxu0 0
  %263 = vmatprep.subr.bf16.mxu0 0
  %264 = vmatpush2.bf16.msra.mxu0 0
  %265 = vmatprep.subr.bf16.mxu0 0
  %266 = vmatpush2.bf16.msra.mxu0 0
  %267 = vmatprep.subr.bf16.mxu0 0
  %268 = vmatpush2.bf16.msra.mxu0 0
  %269 = vmatprep.subr.bf16.mxu0 0
  %270 = vmatpush2.bf16.msra.mxu0 0
  %271 = vmatprep.subr.bf16.mxu0 0
  %272 = vmatpush2.bf16.msra.mxu0 0
  %273 = vmatprep.subr.bf16.mxu0 0
  %274 = vmatpush2.bf16.msra.mxu0 0
  %275 = vmatprep.subr.bf16.mxu0 0
  %276 = vmatpush2.bf16.msra.mxu0 0
  %277 = vmatprep.mubr.bf16.mxu0 0
  %278 = vmatmul.mubr.bf16.gmra.mxu0 %v243
  %v279 = vpop.f32.mrf.mxu0
  %v280 = vadd.f32 0.0, %v279
  %v281 = vpop.f32.mrf.mxu0
  %v282 = vpop.f32.mrf.mxu0
  %v283 = vpop.f32.mrf.mxu0
  %284 = vdwg.mxu0
  %v285 = vld [vmem:[%s5] sm:$0x1]
  %v286 = vld [vmem:[%s6] sm:$0x1]
  %vm287 = vcmask 261120
  %v288 = vsel %vm287, %v280, 0.0
  %v289 = vrot.slane %v288, 4
  %v290 = vadd.f32 %v288, %v289
  %v291 = vrot.slane %v290, 2
  %v292 = vadd.f32 %v290, %v291
  %v293 = vrot.slane %v292, 1
  %v294 = vadd.f32 %v292, %v293
  %v295 = vmul.f32 %v294, %v180
  %v296 = vsub.f32 %v280, %v295
  %v297 = vmul.f32 %v296, %v296
  %v298 = vsel %vm287, %v297, 0.0
  %v299 = vrot.slane %v298, 4
  %v300 = vadd.f32 %v298, %v299
  %v301 = vrot.slane %v300, 2
  %v302 = vadd.f32 %v300, %v301
  %v303 = vrot.slane %v302, 1
  %v304 = vadd.f32 %v302, %v303
  %v305 = vmul.f32 %v304, %v180
  %v306 = vadd.f32 %v305, 1e-05
  %v307 = vrsqrt.pop %v306
  %v308 = vmul.f32 %v307, %v285
  %v309 = vlaneseq
  %v310 = vshrl.u32 %v309, 7
  %v311 = vsub.s32 0, %v310
  %v312 = vrot.slane %v308, %v311
  %v313 = vmul.f32 %v296, %v312
  %v315 = vlaneseq
  %v316 = vshrl.u32 %v315, 7
  %v317 = vsub.s32 0, %v316
  %v318 = vrot.slane %v286, %v317
  %v320 = vadd.f32 %v313, %v318
  %v321 = vmul.f32 %v320, 0.2
  %v322 = vmax.f32 %v320, %v321
  %v323 = vpack.c.bf16 %v322, %v322
  %v324 = vrot.slane %v322, 7
  %v325 = vsel %vm62, 1, 0
  %vm326 = vcmp.eq.s32.totalorder %v325, 1
  %v327 = vsel %vm326, 0.0, %v324
  %v328 = vpack.c.bf16 %v327, %v327
  %v329 = vrot.slane %v322, 1
  %v330 = vsel %vm63, 1, 0
  %vm331 = vcmp.eq.s32.totalorder %v330, 1
  %v332 = vsel %vm331, 0.0, %v329
  %v333 = vpack.c.bf16 %v332, %v332
  %335 = vrot.lane.b32.xlu0 %v328, 32
  %v336 = vpop.permute.xlu0 %335
  %v339 = vsel %vm287, %v323, %v336
  %341 = vrot.lane.b32.xlu0 %v333, 32
  %v342 = vpop.permute.xlu0 %341
  %v344 = vsel %vm287, %v323, %v342
  %v345 = vld [vmem:[%s7] sm:$0xf]
  %v346 = vld [vmem:[%s7 + $0x4] sm:$0xf]
  %v347 = vld [vmem:[%s7 + $0x8] sm:$0xf]
  %v348 = vld [vmem:[%s7 + $0xc] sm:$0xf]
  %v349 = vld [vmem:[%s7 + $0x10] sm:$0xf]
  %v350 = vld [vmem:[%s7 + $0x14] sm:$0xf]
  %v351 = vld [vmem:[%s7 + $0x18] sm:$0xf]
  %v352 = vld [vmem:[%s7 + $0x1c] sm:$0xf]
  %v361 = vunpack.c.l.b16 %v345
  %v362 = vunpack.c.l.b16 %v346
  %v363 = vunpack.c.l.b16 %v347
  %v364 = vunpack.c.l.b16 %v348
  %v365 = vunpack.c.l.b16 %v349
  %v366 = vunpack.c.l.b16 %v350
  %v367 = vunpack.c.l.b16 %v351
  %v368 = vunpack.c.l.b16 %v352
  %v369 = vpack.c.b16 %v362, %v361
  %v370 = vpack.c.b16 %v364, %v363
  %v371 = vpack.c.b16 %v366, %v365
  %v372 = vpack.c.b16 %v368, %v367
  %v377 = vsel %vm172, %v339, 0
  %379 = vmatprep.subr.bf16.mxu0 0
  %380 = vmatpush1.bf16.msra.mxu0 0
  %381 = vmatprep.subr.bf16.mxu0 0
  %382 = vmatpush1.bf16.msra.mxu0 0
  %383 = vmatprep.subr.bf16.mxu0 0
  %384 = vmatpush1.bf16.msra.mxu0 0
  %385 = vmatprep.subr.bf16.mxu0 0
  %386 = vmatpush1.bf16.msra.mxu0 0
  %387 = vmatprep.subr.bf16.mxu0 0
  %388 = vmatpush1.bf16.msra.mxu0 %v372
  %389 = vmatprep.subr.bf16.mxu0 0
  %390 = vmatpush1.bf16.msra.mxu0 %v371
  %391 = vmatprep.subr.bf16.mxu0 0
  %392 = vmatpush1.bf16.msra.mxu0 %v370
  %393 = vmatprep.subr.bf16.mxu0 0
  %394 = vmatpush1.bf16.msra.mxu0 %v369
  %395 = vmatprep.subr.bf16.mxu0 0
  %396 = vmatpush2.bf16.msra.mxu0 0
  %397 = vmatprep.subr.bf16.mxu0 0
  %398 = vmatpush2.bf16.msra.mxu0 0
  %399 = vmatprep.subr.bf16.mxu0 0
  %400 = vmatpush2.bf16.msra.mxu0 0
  %401 = vmatprep.subr.bf16.mxu0 0
  %402 = vmatpush2.bf16.msra.mxu0 0
  %403 = vmatprep.subr.bf16.mxu0 0
  %404 = vmatpush2.bf16.msra.mxu0 0
  %405 = vmatprep.subr.bf16.mxu0 0
  %406 = vmatpush2.bf16.msra.mxu0 0
  %407 = vmatprep.subr.bf16.mxu0 0
  %408 = vmatpush2.bf16.msra.mxu0 0
  %409 = vmatprep.subr.bf16.mxu0 0
  %410 = vmatpush2.bf16.msra.mxu0 0
  %411 = vmatprep.mubr.bf16.mxu0 0
  %412 = vmatmul.mubr.bf16.gmra.mxu0 %v377
  %v413 = vpop.f32.mrf.mxu0
  %v414 = vadd.f32 0.0, %v413
  %v415 = vpop.f32.mrf.mxu0
  %v416 = vpop.f32.mrf.mxu0
  %v417 = vpop.f32.mrf.mxu0
  %418 = vdwg.mxu0
  %s419 = scalar_lea.vmem %s7, 32
  %v420 = vld [vmem:[%s419] sm:$0xf]
  %v421 = vld [vmem:[%s419 + $0x4] sm:$0xf]
  %v422 = vld [vmem:[%s419 + $0x8] sm:$0xf]
  %v423 = vld [vmem:[%s419 + $0xc] sm:$0xf]
  %v424 = vld [vmem:[%s419 + $0x10] sm:$0xf]
  %v425 = vld [vmem:[%s419 + $0x14] sm:$0xf]
  %v426 = vld [vmem:[%s419 + $0x18] sm:$0xf]
  %v427 = vld [vmem:[%s419 + $0x1c] sm:$0xf]
  %v436 = vunpack.c.l.b16 %v420
  %v437 = vunpack.c.l.b16 %v421
  %v438 = vunpack.c.l.b16 %v422
  %v439 = vunpack.c.l.b16 %v423
  %v440 = vunpack.c.l.b16 %v424
  %v441 = vunpack.c.l.b16 %v425
  %v442 = vunpack.c.l.b16 %v426
  %v443 = vunpack.c.l.b16 %v427
  %v444 = vpack.c.b16 %v437, %v436
  %v445 = vpack.c.b16 %v439, %v438
  %v446 = vpack.c.b16 %v441, %v440
  %v447 = vpack.c.b16 %v443, %v442
  %v452 = vsel %vm172, %v344, 0
  %454 = vmatprep.subr.bf16.mxu0 0
  %455 = vmatpush1.bf16.msra.mxu0 0
  %456 = vmatprep.subr.bf16.mxu0 0
  %457 = vmatpush1.bf16.msra.mxu0 0
  %458 = vmatprep.subr.bf16.mxu0 0
  %459 = vmatpush1.bf16.msra.mxu0 0
  %460 = vmatprep.subr.bf16.mxu0 0
  %461 = vmatpush1.bf16.msra.mxu0 0
  %462 = vmatprep.subr.bf16.mxu0 0
  %463 = vmatpush1.bf16.msra.mxu0 %v447
  %464 = vmatprep.subr.bf16.mxu0 0
  %465 = vmatpush1.bf16.msra.mxu0 %v446
  %466 = vmatprep.subr.bf16.mxu0 0
  %467 = vmatpush1.bf16.msra.mxu0 %v445
  %468 = vmatprep.subr.bf16.mxu0 0
  %469 = vmatpush1.bf16.msra.mxu0 %v444
  %470 = vmatprep.subr.bf16.mxu0 0
  %471 = vmatpush2.bf16.msra.mxu0 0
  %472 = vmatprep.subr.bf16.mxu0 0
  %473 = vmatpush2.bf16.msra.mxu0 0
  %474 = vmatprep.subr.bf16.mxu0 0
  %475 = vmatpush2.bf16.msra.mxu0 0
  %476 = vmatprep.subr.bf16.mxu0 0
  %477 = vmatpush2.bf16.msra.mxu0 0
  %478 = vmatprep.subr.bf16.mxu0 0
  %479 = vmatpush2.bf16.msra.mxu0 0
  %480 = vmatprep.subr.bf16.mxu0 0
  %481 = vmatpush2.bf16.msra.mxu0 0
  %482 = vmatprep.subr.bf16.mxu0 0
  %483 = vmatpush2.bf16.msra.mxu0 0
  %484 = vmatprep.subr.bf16.mxu0 0
  %485 = vmatpush2.bf16.msra.mxu0 0
  %486 = vmatprep.mubr.bf16.mxu0 0
  %487 = vmatmul.mubr.bf16.gmra.mxu0 %v452
  %v488 = vpop.f32.mrf.mxu0
  %v489 = vadd.f32 0.0, %v488
  %v490 = vpop.f32.mrf.mxu0
  %v491 = vpop.f32.mrf.mxu0
  %v492 = vpop.f32.mrf.mxu0
  %493 = vdwg.mxu0
  %v494 = vld [vmem:[%s8] sm:$0x1]
  %v495 = vld [vmem:[%s9] sm:$0x1]
  %vm496 = vcmask 130048
  %v497 = vsel %vm496, %v414, 0.0
  %v498 = vrot.slane %v497, 4
  %v499 = vadd.f32 %v497, %v498
  %v500 = vrot.slane %v499, 2
  %v501 = vadd.f32 %v499, %v500
  %v502 = vrot.slane %v501, 1
  %v503 = vadd.f32 %v501, %v502
  %v504 = vsel %vm496, %v489, 0.0
  %v505 = vrot.slane %v504, 4
  %v506 = vadd.f32 %v504, %v505
  %v507 = vrot.slane %v506, 2
  %v508 = vadd.f32 %v506, %v507
  %v509 = vrot.slane %v508, 1
  %v510 = vadd.f32 %v508, %v509
  %v511 = vadd.f32 %v503, %v510
  %v512 = vrcp.pop 16.0
  %v513 = vmul.f32 %v511, %v512
  %v514 = vsub.f32 %v414, %v513
  %v515 = vsub.f32 %v489, %v513
  %v516 = vmul.f32 %v514, %v514
  %v517 = vsel %vm496, %v516, 0.0
  %v518 = vrot.slane %v517, 4
  %v519 = vadd.f32 %v517, %v518
  %v520 = vrot.slane %v519, 2
  %v521 = vadd.f32 %v519, %v520
  %v522 = vrot.slane %v521, 1
  %v523 = vadd.f32 %v521, %v522
  %v524 = vmul.f32 %v515, %v515
  %v525 = vsel %vm496, %v524, 0.0
  %v526 = vrot.slane %v525, 4
  %v527 = vadd.f32 %v525, %v526
  %v528 = vrot.slane %v527, 2
  %v529 = vadd.f32 %v527, %v528
  %v530 = vrot.slane %v529, 1
  %v531 = vadd.f32 %v529, %v530
  %v532 = vadd.f32 %v523, %v531
  %v533 = vmul.f32 %v532, %v512
  %v534 = vadd.f32 %v533, 1e-05
  %v535 = vrsqrt.pop %v534
  %v536 = vmul.f32 %v535, %v494
  %v537 = vlaneseq
  %v538 = vshrl.u32 %v537, 7
  %v539 = vsub.s32 0, %v538
  %v540 = vrot.slane %v536, %v539
  %v541 = vmul.f32 %v514, %v540
  %v543 = vlaneseq
  %v544 = vshrl.u32 %v543, 7
  %v545 = vsub.s32 0, %v544
  %v546 = vrot.slane %v495, %v545
  %v548 = vadd.f32 %v541, %v546
  %v549 = vmul.f32 %v515, %v540
  %v550 = vadd.f32 %v549, %v546
  %v551 = vmul.f32 %v548, 0.2
  %v552 = vmax.f32 %v548, %v551
  %v553 = vmul.f32 %v550, 0.2
  %v554 = vmax.f32 %v550, %v553
  %v555 = vpack.c.bf16 %v554, %v552
  %v556 = vrot.slane %v554, 7
  %v557 = vsel %vm326, 0.0, %v556
  %v558 = vpack.c.bf16 %v557, %v557
  %v559 = vrot.slane %v552, 1
  %v560 = vsel %vm331, 0.0, %v559
  %v561 = vpack.c.bf16 %v560, %v560
  %v563 = vrot.slane %v555, 4
  %vm564 = vcmask 1043456
  %v567 = vsel %vm564, %v558, %v563
  %v569 = vrot.slane %v561, 4
  %v571 = vsel %vm564, %v563, %v569
  %573 = vrot.lane.b32.xlu0 %v567, 16
  %v574 = vpop.permute.xlu0 %573
  %v577 = vsel %vm496, %v555, %v574
  %579 = vrot.lane.b32.xlu0 %v571, 16
  %v580 = vpop.permute.xlu0 %579
  %v582 = vsel %vm496, %v555, %v580
  %v583 = vld [vmem:[%s10] sm:$0xf]
  %v584 = vld [vmem:[%s10 + $0x4] sm:$0xf]
  %v585 = vld [vmem:[%s10 + $0x8] sm:$0xf]
  %v586 = vld [vmem:[%s10 + $0xc] sm:$0xf]
  %v591 = vunpack.c.l.b16 %v583
  %v592 = vunpack.c.l.b16 %v584
  %v593 = vunpack.c.l.b16 %v585
  %v594 = vunpack.c.l.b16 %v586
  %v595 = vpack.c.b16 %v592, %v591
  %v596 = vpack.c.b16 %v594, %v593
  %v599 = vsel %vm287, %v577, 0
  %601 = vmatprep.subr.bf16.mxu0 0
  %602 = vmatpush1.bf16.msra.mxu0 0
  %603 = vmatprep.subr.bf16.mxu0 0
  %604 = vmatpush1.bf16.msra.mxu0 0
  %605 = vmatprep.subr.bf16.mxu0 0
  %606 = vmatpush1.bf16.msra.mxu0 0
  %607 = vmatprep.subr.bf16.mxu0 0
  %608 = vmatpush1.bf16.msra.mxu0 0
  %609 = vmatprep.subr.bf16.mxu0 0
  %610 = vmatpush1.bf16.msra.mxu0 0
  %611 = vmatprep.subr.bf16.mxu0 0
  %612 = vmatpush1.bf16.msra.mxu0 0
  %613 = vmatprep.subr.bf16.mxu0 0
  %614 = vmatpush1.bf16.msra.mxu0 %v596
  %615 = vmatprep.subr.bf16.mxu0 0
  %616 = vmatpush1.bf16.msra.mxu0 %v595
  %617 = vmatprep.subr.bf16.mxu0 0
  %618 = vmatpush2.bf16.msra.mxu0 0
  %619 = vmatprep.subr.bf16.mxu0 0
  %620 = vmatpush2.bf16.msra.mxu0 0
  %621 = vmatprep.subr.bf16.mxu0 0
  %622 = vmatpush2.bf16.msra.mxu0 0
  %623 = vmatprep.subr.bf16.mxu0 0
  %624 = vmatpush2.bf16.msra.mxu0 0
  %625 = vmatprep.subr.bf16.mxu0 0
  %626 = vmatpush2.bf16.msra.mxu0 0
  %627 = vmatprep.subr.bf16.mxu0 0
  %628 = vmatpush2.bf16.msra.mxu0 0
  %629 = vmatprep.subr.bf16.mxu0 0
  %630 = vmatpush2.bf16.msra.mxu0 0
  %631 = vmatprep.subr.bf16.mxu0 0
  %632 = vmatpush2.bf16.msra.mxu0 0
  %633 = vmatprep.mubr.bf16.mxu0 0
  %634 = vmatmul.mubr.bf16.gmra.mxu0 %v599
  %v635 = vpop.f32.mrf.mxu0
  %v636 = vadd.f32 0.0, %v635
  %v637 = vpop.f32.mrf.mxu0
  %v638 = vpop.f32.mrf.mxu0
  %v639 = vadd.f32 0.0, %v638
  %v640 = vpop.f32.mrf.mxu0
  %641 = vdwg.mxu0
  %s642 = scalar_lea.vmem %s10, 16
  %v643 = vld [vmem:[%s642] sm:$0xf]
  %v644 = vld [vmem:[%s642 + $0x4] sm:$0xf]
  %v645 = vld [vmem:[%s642 + $0x8] sm:$0xf]
  %v646 = vld [vmem:[%s642 + $0xc] sm:$0xf]
  %v651 = vunpack.c.l.b16 %v643
  %v652 = vunpack.c.l.b16 %v644
  %v653 = vunpack.c.l.b16 %v645
  %v654 = vunpack.c.l.b16 %v646
  %v655 = vpack.c.b16 %v652, %v651
  %v656 = vpack.c.b16 %v654, %v653
  %v659 = vsel %vm287, %v582, 0
  %661 = vmatprep.subr.bf16.mxu0 0
  %662 = vmatpush1.bf16.msra.mxu0 0
  %663 = vmatprep.subr.bf16.mxu0 0
  %664 = vmatpush1.bf16.msra.mxu0 0
  %665 = vmatprep.subr.bf16.mxu0 0
  %666 = vmatpush1.bf16.msra.mxu0 0
  %667 = vmatprep.subr.bf16.mxu0 0
  %668 = vmatpush1.bf16.msra.mxu0 0
  %669 = vmatprep.subr.bf16.mxu0 0
  %670 = vmatpush1.bf16.msra.mxu0 0
  %671 = vmatprep.subr.bf16.mxu0 0
  %672 = vmatpush1.bf16.msra.mxu0 0
  %673 = vmatprep.subr.bf16.mxu0 0
  %674 = vmatpush1.bf16.msra.mxu0 %v656
  %675 = vmatprep.subr.bf16.mxu0 0
  %676 = vmatpush1.bf16.msra.mxu0 %v655
  %677 = vmatprep.subr.bf16.mxu0 0
  %678 = vmatpush2.bf16.msra.mxu0 0
  %679 = vmatprep.subr.bf16.mxu0 0
  %680 = vmatpush2.bf16.msra.mxu0 0
  %681 = vmatprep.subr.bf16.mxu0 0
  %682 = vmatpush2.bf16.msra.mxu0 0
  %683 = vmatprep.subr.bf16.mxu0 0
  %684 = vmatpush2.bf16.msra.mxu0 0
  %685 = vmatprep.subr.bf16.mxu0 0
  %686 = vmatpush2.bf16.msra.mxu0 0
  %687 = vmatprep.subr.bf16.mxu0 0
  %688 = vmatpush2.bf16.msra.mxu0 0
  %689 = vmatprep.subr.bf16.mxu0 0
  %690 = vmatpush2.bf16.msra.mxu0 0
  %691 = vmatprep.subr.bf16.mxu0 0
  %692 = vmatpush2.bf16.msra.mxu0 0
  %693 = vmatprep.mubr.bf16.mxu0 0
  %694 = vmatmul.mubr.bf16.gmra.mxu0 %v659
  %v695 = vpop.f32.mrf.mxu0
  %v696 = vadd.f32 0.0, %v695
  %v697 = vpop.f32.mrf.mxu0
  %v698 = vpop.f32.mrf.mxu0
  %v699 = vadd.f32 0.0, %v698
  %v700 = vpop.f32.mrf.mxu0
  %701 = vdwg.mxu0
  %v702 = vld [vmem:[%s11] sm:$0x1]
  %v703 = vld [vmem:[%s12] sm:$0x1]
  %vm704 = vcmask 64512
  %v705 = vsel %vm704, %v636, 0.0
  %v706 = vsel %vm704, %v639, 0.0
  %v707 = vadd.f32 %v705, %v706
  %v708 = vrot.slane %v707, 4
  %v709 = vadd.f32 %v707, %v708
  %v710 = vrot.slane %v709, 2
  %v711 = vadd.f32 %v709, %v710
  %v712 = vrot.slane %v711, 1
  %v713 = vadd.f32 %v711, %v712
  %v714 = vsel %vm704, %v696, 0.0
  %v715 = vsel %vm704, %v699, 0.0
  %v716 = vadd.f32 %v714, %v715
  %v717 = vrot.slane %v716, 4
  %v718 = vadd.f32 %v716, %v717
  %v719 = vrot.slane %v718, 2
  %v720 = vadd.f32 %v718, %v719
  %v721 = vrot.slane %v720, 1
  %v722 = vadd.f32 %v720, %v721
  %v723 = vadd.f32 %v713, %v722
  %v724 = vrcp.pop 32.0
  %v725 = vmul.f32 %v723, %v724
  %v726 = vsub.f32 %v636, %v725
  %v727 = vsub.f32 %v639, %v725
  %v728 = vsub.f32 %v696, %v725
  %v729 = vsub.f32 %v699, %v725
  %v730 = vmul.f32 %v726, %v726
  %v731 = vmul.f32 %v727, %v727
  %v732 = vsel %vm704, %v730, 0.0
  %v733 = vsel %vm704, %v731, 0.0
  %v734 = vadd.f32 %v732, %v733
  %v735 = vrot.slane %v734, 4
  %v736 = vadd.f32 %v734, %v735
  %v737 = vrot.slane %v736, 2
  %v738 = vadd.f32 %v736, %v737
  %v739 = vrot.slane %v738, 1
  %v740 = vadd.f32 %v738, %v739
  %v741 = vmul.f32 %v728, %v728
  %v742 = vmul.f32 %v729, %v729
  %v743 = vsel %vm704, %v741, 0.0
  %v744 = vsel %vm704, %v742, 0.0
  %v745 = vadd.f32 %v743, %v744
  %v746 = vrot.slane %v745, 4
  %v747 = vadd.f32 %v745, %v746
  %v748 = vrot.slane %v747, 2
  %v749 = vadd.f32 %v747, %v748
  %v750 = vrot.slane %v749, 1
  %v751 = vadd.f32 %v749, %v750
  %v752 = vadd.f32 %v740, %v751
  %v753 = vmul.f32 %v752, %v724
  %v754 = vadd.f32 %v753, 1e-05
  %v755 = vrsqrt.pop %v754
  %v756 = vmul.f32 %v755, %v702
  %v757 = vlaneseq
  %v758 = vshrl.u32 %v757, 7
  %v759 = vsub.s32 0, %v758
  %v760 = vrot.slane %v756, %v759
  %v761 = vmul.f32 %v726, %v760
  %v762 = vmul.f32 %v727, %v760
  %v764 = vlaneseq
  %v765 = vshrl.u32 %v764, 7
  %v766 = vsub.s32 0, %v765
  %v767 = vrot.slane %v703, %v766
  %v769 = vadd.f32 %v761, %v767
  %v770 = vadd.f32 %v762, %v767
  %v771 = vmul.f32 %v728, %v760
  %v772 = vmul.f32 %v729, %v760
  %v773 = vadd.f32 %v771, %v767
  %v774 = vadd.f32 %v772, %v767
  %v775 = vmul.f32 %v769, 0.2
  %v776 = vmul.f32 %v770, 0.2
  %v777 = vmax.f32 %v769, %v775
  %v778 = vmax.f32 %v770, %v776
  %v779 = vmul.f32 %v773, 0.2
  %v780 = vmul.f32 %v774, 0.2
  %v781 = vmax.f32 %v773, %v779
  %v782 = vmax.f32 %v774, %v780
  %v783 = vpack.c.bf16 %v781, %v777
  %v784 = vpack.c.bf16 %v782, %v778
  %v785 = vrot.slane %v782, 7
  %v786 = vsel %vm326, 0.0, %v785
  %v787 = vpack.c.bf16 %v786, %v786
  %v788 = vrot.slane %v777, 1
  %v789 = vsel %vm331, 0.0, %v788
  %v790 = vpack.c.bf16 %v789, %v789
  %vm793 = vcmask 1043456
  %v794 = vrot.slane %v783, 4
  %v795 = vrot.slane %v784, 4
  %v796 = vsel %vm793, %v794, %v795
  %v799 = vsel %vm564, %v787, %v794
  %v801 = vrot.slane %v790, 4
  %v804 = vsel %vm564, %v795, %v801
  %806 = vrot.lane.b32.xlu0 %v799, 8
  %v807 = vpop.permute.xlu0 %806
  %808 = vrot.lane.b32.xlu0 %v796, 8
  %v809 = vpop.permute.xlu0 %808
  %v812 = vsel %vm704, %v783, %v807
  %v815 = vsel %vm704, %v784, %v809
  %817 = vrot.lane.b32.xlu0 %v804, 8
  %v818 = vpop.permute.xlu0 %817
  %v819 = vsel %vm704, %v783, %v809
  %v821 = vsel %vm704, %v784, %v818
  %v822 = vld [vmem:[%s13] sm:$0xf]
  %v823 = vld [vmem:[%s13 + $0x4] sm:$0xf]
  %v826 = vunpack.c.l.b16 %v822
  %v827 = vunpack.c.l.b16 %v823
  %v828 = vpack.c.b16 %v827, %v826
  %v830 = vsel %vm496, %v812, 0
  %v832 = vsel %vm496, %v815, 0
  %834 = vmatprep.subr.bf16.mxu0 0
  %835 = vmatpush1.bf16.msra.mxu0 0
  %836 = vmatprep.subr.bf16.mxu0 0
  %837 = vmatpush1.bf16.msra.mxu0 0
  %838 = vmatprep.subr.bf16.mxu0 0
  %839 = vmatpush1.bf16.msra.mxu0 0
  %840 = vmatprep.subr.bf16.mxu0 0
  %841 = vmatpush1.bf16.msra.mxu0 0
  %842 = vmatprep.subr.bf16.mxu0 0
  %843 = vmatpush1.bf16.msra.mxu0 0
  %844 = vmatprep.subr.bf16.mxu0 0
  %845 = vmatpush1.bf16.msra.mxu0 0
  %846 = vmatprep.subr.bf16.mxu0 0
  %847 = vmatpush1.bf16.msra.mxu0 0
  %848 = vmatprep.subr.bf16.mxu0 0
  %849 = vmatpush1.bf16.msra.mxu0 %v828
  %850 = vmatprep.subr.bf16.mxu0 0
  %851 = vmatpush2.bf16.msra.mxu0 0
  %852 = vmatprep.subr.bf16.mxu0 0
  %853 = vmatpush2.bf16.msra.mxu0 0
  %854 = vmatprep.subr.bf16.mxu0 0
  %855 = vmatpush2.bf16.msra.mxu0 0
  %856 = vmatprep.subr.bf16.mxu0 0
  %857 = vmatpush2.bf16.msra.mxu0 0
  %858 = vmatprep.subr.bf16.mxu0 0
  %859 = vmatpush2.bf16.msra.mxu0 0
  %860 = vmatprep.subr.bf16.mxu0 0
  %861 = vmatpush2.bf16.msra.mxu0 0
  %862 = vmatprep.subr.bf16.mxu0 0
  %863 = vmatpush2.bf16.msra.mxu0 0
  %864 = vmatprep.subr.bf16.mxu0 0
  %865 = vmatpush2.bf16.msra.mxu0 0
  %866 = vmatprep.mubr.bf16.mxu0 0
  %867 = vmatmul.mubr.bf16.gmra.mxu0 %v830
  %v868 = vpop.f32.mrf.mxu0
  %v869 = vadd.f32 0.0, %v868
  %v870 = vpop.f32.mrf.mxu0
  %v871 = vpop.f32.mrf.mxu0
  %v872 = vadd.f32 0.0, %v871
  %v873 = vpop.f32.mrf.mxu0
  %874 = vmatprep.mubr.bf16.mxu0 0
  %875 = vmatmul.mubr.bf16.gmra.mxu0 %v832
  %v876 = vpop.f32.mrf.mxu0
  %v877 = vadd.f32 0.0, %v876
  %v878 = vpop.f32.mrf.mxu0
  %v879 = vpop.f32.mrf.mxu0
  %v880 = vadd.f32 0.0, %v879
  %v881 = vpop.f32.mrf.mxu0
  %882 = vdwg.mxu0
  %s883 = scalar_lea.vmem %s13, 8
  %v884 = vld [vmem:[%s883] sm:$0xf]
  %v885 = vld [vmem:[%s883 + $0x4] sm:$0xf]
  %v888 = vunpack.c.l.b16 %v884
  %v889 = vunpack.c.l.b16 %v885
  %v890 = vpack.c.b16 %v889, %v888
  %v892 = vsel %vm496, %v819, 0
  %v894 = vsel %vm496, %v821, 0
  %896 = vmatprep.subr.bf16.mxu0 0
  %897 = vmatpush1.bf16.msra.mxu0 0
  %898 = vmatprep.subr.bf16.mxu0 0
  %899 = vmatpush1.bf16.msra.mxu0 0
  %900 = vmatprep.subr.bf16.mxu0 0
  %901 = vmatpush1.bf16.msra.mxu0 0
  %902 = vmatprep.subr.bf16.mxu0 0
  %903 = vmatpush1.bf16.msra.mxu0 0
  %904 = vmatprep.subr.bf16.mxu0 0
  %905 = vmatpush1.bf16.msra.mxu0 0
  %906 = vmatprep.subr.bf16.mxu0 0
  %907 = vmatpush1.bf16.msra.mxu0 0
  %908 = vmatprep.subr.bf16.mxu0 0
  %909 = vmatpush1.bf16.msra.mxu0 0
  %910 = vmatprep.subr.bf16.mxu0 0
  %911 = vmatpush1.bf16.msra.mxu0 %v890
  %912 = vmatprep.subr.bf16.mxu0 0
  %913 = vmatpush2.bf16.msra.mxu0 0
  %914 = vmatprep.subr.bf16.mxu0 0
  %915 = vmatpush2.bf16.msra.mxu0 0
  %916 = vmatprep.subr.bf16.mxu0 0
  %917 = vmatpush2.bf16.msra.mxu0 0
  %918 = vmatprep.subr.bf16.mxu0 0
  %919 = vmatpush2.bf16.msra.mxu0 0
  %920 = vmatprep.subr.bf16.mxu0 0
  %921 = vmatpush2.bf16.msra.mxu0 0
  %922 = vmatprep.subr.bf16.mxu0 0
  %923 = vmatpush2.bf16.msra.mxu0 0
  %924 = vmatprep.subr.bf16.mxu0 0
  %925 = vmatpush2.bf16.msra.mxu0 0
  %926 = vmatprep.subr.bf16.mxu0 0
  %927 = vmatpush2.bf16.msra.mxu0 0
  %928 = vmatprep.mubr.bf16.mxu0 0
  %929 = vmatmul.mubr.bf16.gmra.mxu0 %v892
  %v930 = vpop.f32.mrf.mxu0
  %v931 = vadd.f32 0.0, %v930
  %v932 = vpop.f32.mrf.mxu0
  %v933 = vpop.f32.mrf.mxu0
  %v934 = vadd.f32 0.0, %v933
  %v935 = vpop.f32.mrf.mxu0
  %936 = vmatprep.mubr.bf16.mxu0 0
  %937 = vmatmul.mubr.bf16.gmra.mxu0 %v894
  %v938 = vpop.f32.mrf.mxu0
  %v939 = vadd.f32 0.0, %v938
  %v940 = vpop.f32.mrf.mxu0
  %v941 = vpop.f32.mrf.mxu0
  %v942 = vadd.f32 0.0, %v941
  %v943 = vpop.f32.mrf.mxu0
  %944 = vdwg.mxu0
  %v945 = vpack.c.bf16 %v869, %v869
  %946 = vst [vmem:[%s14] sm:$0xf] %v945
  %v947 = vpack.c.bf16 %v931, %v931
  %s948 = scalar_lea.vmem %s14, 4
  %949 = vst [vmem:[%s948] sm:$0xf] %v947
  %v950 = vpack.c.bf16 %v872, %v872
  %s951 = scalar_lea.vmem %s14, 8
  %952 = vst [vmem:[%s951] sm:$0xf] %v950
  %v953 = vpack.c.bf16 %v934, %v934
  %s954 = scalar_lea.vmem %s14, 12
  %955 = vst [vmem:[%s954] sm:$0xf] %v953
  %v956 = vpack.c.bf16 %v877, %v877
  %s957 = scalar_lea.vmem %s14, 16
  %958 = vst [vmem:[%s957] sm:$0xf] %v956
  %v959 = vpack.c.bf16 %v939, %v939
  %s960 = scalar_lea.vmem %s14, 20
  %961 = vst [vmem:[%s960] sm:$0xf] %v959
  %v962 = vpack.c.bf16 %v880, %v880
  %s963 = scalar_lea.vmem %s14, 24
  %964 = vst [vmem:[%s963] sm:$0xf] %v962
  %v965 = vpack.c.bf16 %v942, %v942
  %s966 = scalar_lea.vmem %s14, 28
  %967 = vst [vmem:[%s966] sm:$0xf] %v965
  // Predicated region
  $region58: #{cub_sent_decoder_map.2} parent=0 // pred_check
    _
  $region59: #{cub_sent_decoder_map.2} parent=0 // pred_check_branch
    %969 = sbr.rel (0) target = $region61
  $region60: #{cub_sent_decoder_map.2} parent=0 // pred_region
    _
  $region61: #{cub_sent_decoder_map.2} parent=0 // pred_fallthru
    _
  // Predicated region
  $region62: #{cub_sent_decoder_map.2} parent=0 // pred_check
    _
  $region63: #{cub_sent_decoder_map.2} parent=0 // pred_check_branch
    %971 = sbr.rel (0) target = $region65
  $region64: #{cub_sent_decoder_map.2} parent=0 // pred_region
    _
  $region65: #{cub_sent_decoder_map.2} parent=0 // pred_fallthru
    _

</llo_original>
